<compile_context>
chip_gen: v5e
topology: v5e:2x2
jax: 0.10.0
libtpu: 0.0.40
codegen_flags: <defaults>
</compile_context>

<pallas_src>
import functools
import math

import jax
import jax.numpy as jnp
import numpy as np
from jax import lax
from jax.experimental import pallas as pl
from jax.experimental.pallas import tpu as pltpu

LN_EPS = 1e-5        # torch.nn.LayerNorm default eps
MASK_FILL = -1e9     # masked_fill_ value in MovieMcanMultiHeadAttention


def _layer_norm(h, g, b):
    mu = jnp.mean(h, axis=-1, keepdims=True)
    xc = h - mu
    var = jnp.mean(xc * xc, axis=-1, keepdims=True)
    return xc * lax.rsqrt(var + LN_EPS) * g + b


def _self_attention_kernel(x_ref, mask_ref,
                           wq_ref, bq_ref, wk_ref, bk_ref, wv_ref, bv_ref,
                           wo_ref, bo_ref,
                           w1_ref, b1_ref, w2_ref, b2_ref,
                           g_mha_ref, b_mha_ref, g_fcn_ref, b_fcn_ref,
                           out_ref, *, num_heads):
    tb, L, D = x_ref.shape
    dk = D // num_heads
    scale = 1.0 / math.sqrt(dk)

    x2d = x_ref[...].reshape(tb * L, D)                    # (TB*L, D) rows for the MXU

    # ---- multi-head attention (dropout on p_attn is identity in eval) ----------
    q = jnp.dot(x2d, wq_ref[...], preferred_element_type=jnp.float32) + bq_ref[...]
    k = jnp.dot(x2d, wk_ref[...], preferred_element_type=jnp.float32) + bk_ref[...]
    v = jnp.dot(x2d, wv_ref[...], preferred_element_type=jnp.float32) + bv_ref[...]

    key_masked = mask_ref[...] > 0.5                       # (TB, 1, L); True = padded key

    ctx_heads = []
    for h in range(num_heads):                             # static unroll over heads
        sl = slice(h * dk, (h + 1) * dk)
        qh = q[:, sl].reshape(tb, L, dk)
        kh = k[:, sl].reshape(tb, L, dk)
        vh = v[:, sl].reshape(tb, L, dk)
        s = jnp.einsum("bqd,bkd->bqk", qh, kh,
                       preferred_element_type=jnp.float32) * scale
        s = jnp.where(key_masked, jnp.float32(MASK_FILL), s)
        m = jnp.max(s, axis=-1, keepdims=True)
        e = jnp.exp(s - m)                                 # 1 exp per element
        p = e * pl.reciprocal(jnp.sum(e, axis=-1, keepdims=True))   # 1 recip per row
        ctx_heads.append(jnp.einsum("bqk,bkd->bqd", p, vh,
                                    preferred_element_type=jnp.float32))
    ctx = jnp.concatenate(ctx_heads, axis=-1).reshape(tb * L, D)
    mha = jnp.dot(ctx, wo_ref[...], preferred_element_type=jnp.float32) + bo_ref[...]

    # ---- residual + LN, FFN, residual + LN --------------------------------------
    h1 = _layer_norm(x2d + mha, g_mha_ref[...], b_mha_ref[...])
    ffn = jnp.maximum(
        jnp.dot(h1, w1_ref[...], preferred_element_type=jnp.float32) + b1_ref[...], 0.0)
    ffn = jnp.dot(ffn, w2_ref[...], preferred_element_type=jnp.float32) + b2_ref[...]
    out = _layer_norm(h1 + ffn, g_fcn_ref[...], b_fcn_ref[...])

    out_ref[...] = out.reshape(tb, L, D)


def _pick_block_b(B, L):
    """Batch block: >=256 MXU rows if possible, keep >=2 grid steps when B allows."""
    divisors = [d for d in range(1, B + 1) if B % d == 0]
    for d in divisors:
        if d * L >= 256 and (B // d >= 2 or d == B):
            return d
    for d in reversed(divisors):
        if B // d >= 2:
            return d
    return B


def self_attention(x, x_mask, params, num_heads, block_b=None):
    """x: (B, L, D) f32, x_mask: (B, L) bool (True = padding), params: see init_params."""
    B, L, D = x.shape
    if block_b is None:
        block_b = _pick_block_b(B, L)
    assert B % block_b == 0, "batch must be divisible by the batch block"
    assert D % num_heads == 0

    mask_f = x_mask.astype(jnp.float32).reshape(B, 1, L)   # lane-dense mask layout

    kernel = functools.partial(_self_attention_kernel, num_heads=num_heads)

    in_specs = [
        pl.BlockSpec((block_b, L, D), lambda i: (i, 0, 0)),     # x: blocked over batch
        pl.BlockSpec((block_b, 1, L), lambda i: (i, 0, 0)),     # mask
    ] + [
        # Weights / biases / LN params: full blocks, constant index_map -> VMEM-resident.
        pl.BlockSpec(p.shape, (lambda i, n=p.ndim: (0,) * n))
        for p in params
    ]

    return pl.pallas_call(
        kernel,
        out_shape=jax.ShapeDtypeStruct((B, L, D), jnp.float32),
        grid_spec=pltpu.PrefetchScalarGridSpec(
            num_scalar_prefetch=0,
            grid=(B // block_b,),
            in_specs=in_specs,
            out_specs=pl.BlockSpec((block_b, L, D), lambda i: (i, 0, 0)),
        ),
        compiler_params=pltpu.CompilerParams(
            dimension_semantics=("parallel",)),
    )(x, mask_f, *params)


def init_params(key, dim):
    ks = jax.random.split(key, 16)

    def lin(kw, kb, din, dout):
        w = jax.random.normal(kw, (din, dout), jnp.float32) / np.sqrt(din)
        b = jax.random.normal(kb, (1, dout), jnp.float32) * 0.02
        return w, b

    wq, bq = lin(ks[0], ks[1], dim, dim)
    wk, bk = lin(ks[2], ks[3], dim, dim)
    wv, bv = lin(ks[4], ks[5], dim, dim)
    wo, bo = lin(ks[6], ks[7], dim, dim)
    w1, b1 = lin(ks[8], ks[9], dim, 4 * dim)
    w2, b2 = lin(ks[10], ks[11], 4 * dim, dim)
    g_mha = 1.0 + 0.1 * jax.random.normal(ks[12], (1, dim), jnp.float32)
    b_mha = 0.1 * jax.random.normal(ks[13], (1, dim), jnp.float32)
    g_fcn = 1.0 + 0.1 * jax.random.normal(ks[14], (1, dim), jnp.float32)
    b_fcn = 0.1 * jax.random.normal(ks[15], (1, dim), jnp.float32)
    return (wq, bq, wk, bk, wv, bv, wo, bo, w1, b1, w2, b2,
            g_mha, b_mha, g_fcn, b_fcn)


def reference(x, x_mask, params, num_heads):
    (wq, bq, wk, bk, wv, bv, wo, bo,
     w1, b1, w2, b2, g_mha, b_mha, g_fcn, b_fcn) = params
    B, L, D = x.shape
    dk = D // num_heads

    def split(t):
        return t.reshape(B, L, num_heads, dk).transpose(0, 2, 1, 3)

    q = split(x @ wq + bq)
    k = split(x @ wk + bk)
    v = split(x @ wv + bv)
    s = jnp.einsum("bhqd,bhkd->bhqk", q, k) / math.sqrt(dk)
    s = jnp.where(x_mask[:, None, None, :], MASK_FILL, s)
    p = jax.nn.softmax(s, axis=-1)
    ctx = jnp.einsum("bhqk,bhkd->bhqd", p, v).transpose(0, 2, 1, 3).reshape(B, L, D)
    mha = ctx @ wo + bo

    def ln(t, g, b):
        mu = jnp.mean(t, axis=-1, keepdims=True)
        var = jnp.mean((t - mu) ** 2, axis=-1, keepdims=True)
        return (t - mu) / jnp.sqrt(var + LN_EPS) * g + b

    h1 = ln(x + mha, g_mha, b_mha)
    ffn = jnp.maximum(h1 @ w1 + b1, 0.0) @ w2 + b2
    return ln(h1 + ffn, g_fcn, b_fcn)


if __name__ == "__main__":
    B, L, DIM, HEADS = 2, 8, 32, 4

    key = jax.random.PRNGKey(0)
    kx, kp = jax.random.split(key)
    x = jax.random.normal(kx, (B, L, DIM), jnp.float32)
    lengths = jnp.array([6, 8], dtype=jnp.int32)             # valid tokens per row
    x_mask = jnp.arange(L)[None, :] >= lengths[:, None]      # True = padding (torch semantics)
    params = init_params(kp, DIM)

    out = self_attention(x, x_mask, params, num_heads=HEADS)
    out = jax.block_until_ready(out)

    ref = reference(x, x_mask, params, HEADS)
    assert out.shape == (B, L, DIM)
    assert jnp.allclose(out, ref, atol=1e-4, rtol=1e-4), \
        float(jnp.max(jnp.abs(out - ref)))

    print("KERNEL_OK")
</pallas_src>

<mosaic_0001>
module attributes {stable_mosaic.version = 11 : i64} {
  func.func @_self_attention_kernel(%arg0: i32, %arg1: memref<1x8x32xf32, #tpu.memory_space<vmem>>, %arg2: memref<1x1x8xf32, #tpu.memory_space<vmem>>, %arg3: memref<32x32xf32, #tpu.memory_space<vmem>>, %arg4: memref<1x32xf32, #tpu.memory_space<vmem>>, %arg5: memref<32x32xf32, #tpu.memory_space<vmem>>, %arg6: memref<1x32xf32, #tpu.memory_space<vmem>>, %arg7: memref<32x32xf32, #tpu.memory_space<vmem>>, %arg8: memref<1x32xf32, #tpu.memory_space<vmem>>, %arg9: memref<32x32xf32, #tpu.memory_space<vmem>>, %arg10: memref<1x32xf32, #tpu.memory_space<vmem>>, %arg11: memref<32x128xf32, #tpu.memory_space<vmem>>, %arg12: memref<1x128xf32, #tpu.memory_space<vmem>>, %arg13: memref<128x32xf32, #tpu.memory_space<vmem>>, %arg14: memref<1x32xf32, #tpu.memory_space<vmem>>, %arg15: memref<1x32xf32, #tpu.memory_space<vmem>>, %arg16: memref<1x32xf32, #tpu.memory_space<vmem>>, %arg17: memref<1x32xf32, #tpu.memory_space<vmem>>, %arg18: memref<1x32xf32, #tpu.memory_space<vmem>>, %arg19: memref<1x8x32xf32, #tpu.memory_space<vmem>>) attributes {dimension_semantics = [#tpu.dimension_semantics<parallel>], iteration_bounds = array<i64: 2>, scalar_prefetch = 0 : i64, scratch_operands = 0 : i64, tpu.core_type = #tpu.core_type<tc>, window_params = [{transform_indices = @transform_0, window_bounds = array<i64: 1, 8, 32>}, {transform_indices = @transform_1, window_bounds = array<i64: 1, 1, 8>}, {pipeline_mode = #tpu.pipeline_mode<synchronous>, transform_indices = @transform_2, window_bounds = array<i64: 32, 32>}, {pipeline_mode = #tpu.pipeline_mode<synchronous>, transform_indices = @transform_3, window_bounds = array<i64: 1, 32>}, {pipeline_mode = #tpu.pipeline_mode<synchronous>, transform_indices = @transform_4, window_bounds = array<i64: 32, 32>}, {pipeline_mode = #tpu.pipeline_mode<synchronous>, transform_indices = @transform_5, window_bounds = array<i64: 1, 32>}, {pipeline_mode = #tpu.pipeline_mode<synchronous>, transform_indices = @transform_6, window_bounds = array<i64: 32, 32>}, {pipeline_mode = #tpu.pipeline_mode<synchronous>, transform_indices = @transform_7, window_bounds = array<i64: 1, 32>}, {pipeline_mode = #tpu.pipeline_mode<synchronous>, transform_indices = @transform_8, window_bounds = array<i64: 32, 32>}, {pipeline_mode = #tpu.pipeline_mode<synchronous>, transform_indices = @transform_9, window_bounds = array<i64: 1, 32>}, {pipeline_mode = #tpu.pipeline_mode<synchronous>, transform_indices = @transform_10, window_bounds = array<i64: 32, 128>}, {pipeline_mode = #tpu.pipeline_mode<synchronous>, transform_indices = @transform_11, window_bounds = array<i64: 1, 128>}, {pipeline_mode = #tpu.pipeline_mode<synchronous>, transform_indices = @transform_12, window_bounds = array<i64: 128, 32>}, {pipeline_mode = #tpu.pipeline_mode<synchronous>, transform_indices = @transform_13, window_bounds = array<i64: 1, 32>}, {pipeline_mode = #tpu.pipeline_mode<synchronous>, transform_indices = @transform_14, window_bounds = array<i64: 1, 32>}, {pipeline_mode = #tpu.pipeline_mode<synchronous>, transform_indices = @transform_15, window_bounds = array<i64: 1, 32>}, {pipeline_mode = #tpu.pipeline_mode<synchronous>, transform_indices = @transform_16, window_bounds = array<i64: 1, 32>}, {pipeline_mode = #tpu.pipeline_mode<synchronous>, transform_indices = @transform_17, window_bounds = array<i64: 1, 32>}, {transform_indices = @transform_18, window_bounds = array<i64: 1, 8, 32>}]} {
    %c0 = arith.constant 0 : index
    %c0_0 = arith.constant 0 : index
    %c0_1 = arith.constant 0 : index
    %0 = vector.load %arg1[%c0, %c0_0, %c0_1] : memref<1x8x32xf32, #tpu.memory_space<vmem>>, vector<1x8x32xf32>
    %1 = vector.shape_cast %0 : vector<1x8x32xf32> to vector<8x32xf32>
    %c0_2 = arith.constant 0 : index
    %c0_3 = arith.constant 0 : index
    %2 = vector.load %arg3[%c0_2, %c0_3] : memref<32x32xf32, #tpu.memory_space<vmem>>, vector<32x32xf32>
    %cst = arith.constant dense<0.000000e+00> : vector<8x32xf32>
    %3 = tpu.matmul %1, %2, %cst {dimension_numbers = #tpu.dot_dimension_numbers<[1], [0], [0], [1], [0, 0, 1, 1], [], []>} : vector<8x32xf32>, vector<32x32xf32>, vector<8x32xf32> -> vector<8x32xf32>
    %c0_4 = arith.constant 0 : index
    %c0_5 = arith.constant 0 : index
    %4 = vector.load %arg4[%c0_4, %c0_5] : memref<1x32xf32, #tpu.memory_space<vmem>>, vector<1x32xf32>
    %5 = vector.broadcast %4 : vector<1x32xf32> to vector<8x32xf32>
    %6 = arith.addf %3, %5 : vector<8x32xf32>
    %c0_6 = arith.constant 0 : index
    %c0_7 = arith.constant 0 : index
    %7 = vector.load %arg5[%c0_6, %c0_7] : memref<32x32xf32, #tpu.memory_space<vmem>>, vector<32x32xf32>
    %cst_8 = arith.constant dense<0.000000e+00> : vector<8x32xf32>
    %8 = tpu.matmul %1, %7, %cst_8 {dimension_numbers = #tpu.dot_dimension_numbers<[1], [0], [0], [1], [0, 0, 1, 1], [], []>} : vector<8x32xf32>, vector<32x32xf32>, vector<8x32xf32> -> vector<8x32xf32>
    %c0_9 = arith.constant 0 : index
    %c0_10 = arith.constant 0 : index
    %9 = vector.load %arg6[%c0_9, %c0_10] : memref<1x32xf32, #tpu.memory_space<vmem>>, vector<1x32xf32>
    %10 = vector.broadcast %9 : vector<1x32xf32> to vector<8x32xf32>
    %11 = arith.addf %8, %10 : vector<8x32xf32>
    %c0_11 = arith.constant 0 : index
    %c0_12 = arith.constant 0 : index
    %12 = vector.load %arg7[%c0_11, %c0_12] : memref<32x32xf32, #tpu.memory_space<vmem>>, vector<32x32xf32>
    %cst_13 = arith.constant dense<0.000000e+00> : vector<8x32xf32>
    %13 = tpu.matmul %1, %12, %cst_13 {dimension_numbers = #tpu.dot_dimension_numbers<[1], [0], [0], [1], [0, 0, 1, 1], [], []>} : vector<8x32xf32>, vector<32x32xf32>, vector<8x32xf32> -> vector<8x32xf32>
    %c0_14 = arith.constant 0 : index
    %c0_15 = arith.constant 0 : index
    %14 = vector.load %arg8[%c0_14, %c0_15] : memref<1x32xf32, #tpu.memory_space<vmem>>, vector<1x32xf32>
    %15 = vector.broadcast %14 : vector<1x32xf32> to vector<8x32xf32>
    %16 = arith.addf %13, %15 : vector<8x32xf32>
    %c0_16 = arith.constant 0 : index
    %c0_17 = arith.constant 0 : index
    %c0_18 = arith.constant 0 : index
    %17 = vector.load %arg2[%c0_16, %c0_17, %c0_18] : memref<1x1x8xf32, #tpu.memory_space<vmem>>, vector<1x1x8xf32>
    %cst_19 = arith.constant 5.000000e-01 : f32
    %18 = vector.broadcast %cst_19 : f32 to vector<1x1x8xf32>
    %19 = arith.cmpf ogt, %17, %18 : vector<1x1x8xf32>
    %20 = vector.extract_strided_slice %6 {offsets = [0, 0], sizes = [8, 8], strides = [1, 1]} : vector<8x32xf32> to vector<8x8xf32>
    %21 = vector.shape_cast %20 : vector<8x8xf32> to vector<1x8x8xf32>
    %22 = vector.extract_strided_slice %11 {offsets = [0, 0], sizes = [8, 8], strides = [1, 1]} : vector<8x32xf32> to vector<8x8xf32>
    %23 = vector.shape_cast %22 : vector<8x8xf32> to vector<1x8x8xf32>
    %24 = vector.extract_strided_slice %16 {offsets = [0, 0], sizes = [8, 8], strides = [1, 1]} : vector<8x32xf32> to vector<8x8xf32>
    %25 = vector.shape_cast %24 : vector<8x8xf32> to vector<1x8x8xf32>
    "tpu.trace_start"() <{level = 10 : i32, message = "bqd,bkd->bqk"}> : () -> ()
    %cst_20 = arith.constant dense<0.000000e+00> : vector<1x8x8xf32>
    %26 = tpu.matmul %21, %23, %cst_20 {dimension_numbers = #tpu.dot_dimension_numbers<[2], [2], [1], [1], [0, 0, 0, 1, 1, 1], [0], [0]>} : vector<1x8x8xf32>, vector<1x8x8xf32>, vector<1x8x8xf32> -> vector<1x8x8xf32>
    "tpu.trace_stop"() : () -> ()
    %cst_21 = arith.constant 0.353553385 : f32
    %27 = vector.broadcast %cst_21 : f32 to vector<1x8x8xf32>
    %28 = arith.mulf %26, %27 : vector<1x8x8xf32>
    %cst_22 = arith.constant -1.000000e+09 : f32
    %29 = vector.shape_cast %19 : vector<1x1x8xi1> to vector<1x1x8xi1>
    %30 = vector.broadcast %29 : vector<1x1x8xi1> to vector<1x8x8xi1>
    %31 = vector.broadcast %cst_22 : f32 to vector<1x8x8xf32>
    %32 = arith.select %30, %31, %28 : vector<1x8x8xi1>, vector<1x8x8xf32>
    %cst_23 = arith.constant dense<0xFF800000> : vector<1x8xf32>
    %33 = vector.multi_reduction <maximumf>, %32, %cst_23 [2] : vector<1x8x8xf32> to vector<1x8xf32>
    %34 = vector.shape_cast %33 : vector<1x8xf32> to vector<1x8x1xf32>
    %35 = vector.broadcast %34 : vector<1x8x1xf32> to vector<1x8x8xf32>
    %36 = arith.subf %32, %35 : vector<1x8x8xf32>
    %37 = math.exp %36 : vector<1x8x8xf32>
    %cst_24 = arith.constant dense<0.000000e+00> : vector<1x8xf32>
    %38 = vector.multi_reduction <add>, %37, %cst_24 [2] : vector<1x8x8xf32> to vector<1x8xf32>
    %39 = vector.shape_cast %38 : vector<1x8xf32> to vector<1x8x1xf32>
    %40 = tpu.reciprocal %39 : vector<1x8x1xf32> -> vector<1x8x1xf32>
    %41 = vector.broadcast %40 : vector<1x8x1xf32> to vector<1x8x8xf32>
    %42 = arith.mulf %37, %41 : vector<1x8x8xf32>
    "tpu.trace_start"() <{level = 10 : i32, message = "bqk,bkd->bqd"}> : () -> ()
    %cst_25 = arith.constant dense<0.000000e+00> : vector<1x8x8xf32>
    %43 = tpu.matmul %42, %25, %cst_25 {dimension_numbers = #tpu.dot_dimension_numbers<[2], [1], [1], [2], [0, 0, 0, 1, 1, 2], [0], [0]>} : vector<1x8x8xf32>, vector<1x8x8xf32>, vector<1x8x8xf32> -> vector<1x8x8xf32>
    "tpu.trace_stop"() : () -> ()
    %44 = vector.extract_strided_slice %6 {offsets = [0, 8], sizes = [8, 8], strides = [1, 1]} : vector<8x32xf32> to vector<8x8xf32>
    %45 = vector.shape_cast %44 : vector<8x8xf32> to vector<1x8x8xf32>
    %46 = vector.extract_strided_slice %11 {offsets = [0, 8], sizes = [8, 8], strides = [1, 1]} : vector<8x32xf32> to vector<8x8xf32>
    %47 = vector.shape_cast %46 : vector<8x8xf32> to vector<1x8x8xf32>
    %48 = vector.extract_strided_slice %16 {offsets = [0, 8], sizes = [8, 8], strides = [1, 1]} : vector<8x32xf32> to vector<8x8xf32>
    %49 = vector.shape_cast %48 : vector<8x8xf32> to vector<1x8x8xf32>
    "tpu.trace_start"() <{level = 10 : i32, message = "bqd,bkd->bqk"}> : () -> ()
    %cst_26 = arith.constant dense<0.000000e+00> : vector<1x8x8xf32>
    %50 = tpu.matmul %45, %47, %cst_26 {dimension_numbers = #tpu.dot_dimension_numbers<[2], [2], [1], [1], [0, 0, 0, 1, 1, 1], [0], [0]>} : vector<1x8x8xf32>, vector<1x8x8xf32>, vector<1x8x8xf32> -> vector<1x8x8xf32>
    "tpu.trace_stop"() : () -> ()
    %cst_27 = arith.constant 0.353553385 : f32
    %51 = vector.broadcast %cst_27 : f32 to vector<1x8x8xf32>
    %52 = arith.mulf %50, %51 : vector<1x8x8xf32>
    %cst_28 = arith.constant -1.000000e+09 : f32
    %53 = vector.shape_cast %19 : vector<1x1x8xi1> to vector<1x1x8xi1>
    %54 = vector.broadcast %53 : vector<1x1x8xi1> to vector<1x8x8xi1>
    %55 = vector.broadcast %cst_28 : f32 to vector<1x8x8xf32>
    %56 = arith.select %54, %55, %52 : vector<1x8x8xi1>, vector<1x8x8xf32>
    %cst_29 = arith.constant dense<0xFF800000> : vector<1x8xf32>
    %57 = vector.multi_reduction <maximumf>, %56, %cst_29 [2] : vector<1x8x8xf32> to vector<1x8xf32>
    %58 = vector.shape_cast %57 : vector<1x8xf32> to vector<1x8x1xf32>
    %59 = vector.broadcast %58 : vector<1x8x1xf32> to vector<1x8x8xf32>
    %60 = arith.subf %56, %59 : vector<1x8x8xf32>
    %61 = math.exp %60 : vector<1x8x8xf32>
    %cst_30 = arith.constant dense<0.000000e+00> : vector<1x8xf32>
    %62 = vector.multi_reduction <add>, %61, %cst_30 [2] : vector<1x8x8xf32> to vector<1x8xf32>
    %63 = vector.shape_cast %62 : vector<1x8xf32> to vector<1x8x1xf32>
    %64 = tpu.reciprocal %63 : vector<1x8x1xf32> -> vector<1x8x1xf32>
    %65 = vector.broadcast %64 : vector<1x8x1xf32> to vector<1x8x8xf32>
    %66 = arith.mulf %61, %65 : vector<1x8x8xf32>
    "tpu.trace_start"() <{level = 10 : i32, message = "bqk,bkd->bqd"}> : () -> ()
    %cst_31 = arith.constant dense<0.000000e+00> : vector<1x8x8xf32>
    %67 = tpu.matmul %66, %49, %cst_31 {dimension_numbers = #tpu.dot_dimension_numbers<[2], [1], [1], [2], [0, 0, 0, 1, 1, 2], [0], [0]>} : vector<1x8x8xf32>, vector<1x8x8xf32>, vector<1x8x8xf32> -> vector<1x8x8xf32>
    "tpu.trace_stop"() : () -> ()
    %68 = vector.extract_strided_slice %6 {offsets = [0, 16], sizes = [8, 8], strides = [1, 1]} : vector<8x32xf32> to vector<8x8xf32>
    %69 = vector.shape_cast %68 : vector<8x8xf32> to vector<1x8x8xf32>
    %70 = vector.extract_strided_slice %11 {offsets = [0, 16], sizes = [8, 8], strides = [1, 1]} : vector<8x32xf32> to vector<8x8xf32>
    %71 = vector.shape_cast %70 : vector<8x8xf32> to vector<1x8x8xf32>
    %72 = vector.extract_strided_slice %16 {offsets = [0, 16], sizes = [8, 8], strides = [1, 1]} : vector<8x32xf32> to vector<8x8xf32>
    %73 = vector.shape_cast %72 : vector<8x8xf32> to vector<1x8x8xf32>
    "tpu.trace_start"() <{level = 10 : i32, message = "bqd,bkd->bqk"}> : () -> ()
    %cst_32 = arith.constant dense<0.000000e+00> : vector<1x8x8xf32>
    %74 = tpu.matmul %69, %71, %cst_32 {dimension_numbers = #tpu.dot_dimension_numbers<[2], [2], [1], [1], [0, 0, 0, 1, 1, 1], [0], [0]>} : vector<1x8x8xf32>, vector<1x8x8xf32>, vector<1x8x8xf32> -> vector<1x8x8xf32>
    "tpu.trace_stop"() : () -> ()
    %cst_33 = arith.constant 0.353553385 : f32
    %75 = vector.broadcast %cst_33 : f32 to vector<1x8x8xf32>
    %76 = arith.mulf %74, %75 : vector<1x8x8xf32>
    %cst_34 = arith.constant -1.000000e+09 : f32
    %77 = vector.shape_cast %19 : vector<1x1x8xi1> to vector<1x1x8xi1>
    %78 = vector.broadcast %77 : vector<1x1x8xi1> to vector<1x8x8xi1>
    %79 = vector.broadcast %cst_34 : f32 to vector<1x8x8xf32>
    %80 = arith.select %78, %79, %76 : vector<1x8x8xi1>, vector<1x8x8xf32>
    %cst_35 = arith.constant dense<0xFF800000> : vector<1x8xf32>
    %81 = vector.multi_reduction <maximumf>, %80, %cst_35 [2] : vector<1x8x8xf32> to vector<1x8xf32>
    %82 = vector.shape_cast %81 : vector<1x8xf32> to vector<1x8x1xf32>
    %83 = vector.broadcast %82 : vector<1x8x1xf32> to vector<1x8x8xf32>
    %84 = arith.subf %80, %83 : vector<1x8x8xf32>
    %85 = math.exp %84 : vector<1x8x8xf32>
    %cst_36 = arith.constant dense<0.000000e+00> : vector<1x8xf32>
    %86 = vector.multi_reduction <add>, %85, %cst_36 [2] : vector<1x8x8xf32> to vector<1x8xf32>
    %87 = vector.shape_cast %86 : vector<1x8xf32> to vector<1x8x1xf32>
    %88 = tpu.reciprocal %87 : vector<1x8x1xf32> -> vector<1x8x1xf32>
    %89 = vector.broadcast %88 : vector<1x8x1xf32> to vector<1x8x8xf32>
    %90 = arith.mulf %85, %89 : vector<1x8x8xf32>
    "tpu.trace_start"() <{level = 10 : i32, message = "bqk,bkd->bqd"}> : () -> ()
    %cst_37 = arith.constant dense<0.000000e+00> : vector<1x8x8xf32>
    %91 = tpu.matmul %90, %73, %cst_37 {dimension_numbers = #tpu.dot_dimension_numbers<[2], [1], [1], [2], [0, 0, 0, 1, 1, 2], [0], [0]>} : vector<1x8x8xf32>, vector<1x8x8xf32>, vector<1x8x8xf32> -> vector<1x8x8xf32>
    "tpu.trace_stop"() : () -> ()
    %92 = vector.extract_strided_slice %6 {offsets = [0, 24], sizes = [8, 8], strides = [1, 1]} : vector<8x32xf32> to vector<8x8xf32>
    %93 = vector.shape_cast %92 : vector<8x8xf32> to vector<1x8x8xf32>
    %94 = vector.extract_strided_slice %11 {offsets = [0, 24], sizes = [8, 8], strides = [1, 1]} : vector<8x32xf32> to vector<8x8xf32>
    %95 = vector.shape_cast %94 : vector<8x8xf32> to vector<1x8x8xf32>
    %96 = vector.extract_strided_slice %16 {offsets = [0, 24], sizes = [8, 8], strides = [1, 1]} : vector<8x32xf32> to vector<8x8xf32>
    %97 = vector.shape_cast %96 : vector<8x8xf32> to vector<1x8x8xf32>
    "tpu.trace_start"() <{level = 10 : i32, message = "bqd,bkd->bqk"}> : () -> ()
    %cst_38 = arith.constant dense<0.000000e+00> : vector<1x8x8xf32>
    %98 = tpu.matmul %93, %95, %cst_38 {dimension_numbers = #tpu.dot_dimension_numbers<[2], [2], [1], [1], [0, 0, 0, 1, 1, 1], [0], [0]>} : vector<1x8x8xf32>, vector<1x8x8xf32>, vector<1x8x8xf32> -> vector<1x8x8xf32>
    "tpu.trace_stop"() : () -> ()
    %cst_39 = arith.constant 0.353553385 : f32
    %99 = vector.broadcast %cst_39 : f32 to vector<1x8x8xf32>
    %100 = arith.mulf %98, %99 : vector<1x8x8xf32>
    %cst_40 = arith.constant -1.000000e+09 : f32
    %101 = vector.shape_cast %19 : vector<1x1x8xi1> to vector<1x1x8xi1>
    %102 = vector.broadcast %101 : vector<1x1x8xi1> to vector<1x8x8xi1>
    %103 = vector.broadcast %cst_40 : f32 to vector<1x8x8xf32>
    %104 = arith.select %102, %103, %100 : vector<1x8x8xi1>, vector<1x8x8xf32>
    %cst_41 = arith.constant dense<0xFF800000> : vector<1x8xf32>
    %105 = vector.multi_reduction <maximumf>, %104, %cst_41 [2] : vector<1x8x8xf32> to vector<1x8xf32>
    %106 = vector.shape_cast %105 : vector<1x8xf32> to vector<1x8x1xf32>
    %107 = vector.broadcast %106 : vector<1x8x1xf32> to vector<1x8x8xf32>
    %108 = arith.subf %104, %107 : vector<1x8x8xf32>
    %109 = math.exp %108 : vector<1x8x8xf32>
    %cst_42 = arith.constant dense<0.000000e+00> : vector<1x8xf32>
    %110 = vector.multi_reduction <add>, %109, %cst_42 [2] : vector<1x8x8xf32> to vector<1x8xf32>
    %111 = vector.shape_cast %110 : vector<1x8xf32> to vector<1x8x1xf32>
    %112 = tpu.reciprocal %111 : vector<1x8x1xf32> -> vector<1x8x1xf32>
    %113 = vector.broadcast %112 : vector<1x8x1xf32> to vector<1x8x8xf32>
    %114 = arith.mulf %109, %113 : vector<1x8x8xf32>
    "tpu.trace_start"() <{level = 10 : i32, message = "bqk,bkd->bqd"}> : () -> ()
    %cst_43 = arith.constant dense<0.000000e+00> : vector<1x8x8xf32>
    %115 = tpu.matmul %114, %97, %cst_43 {dimension_numbers = #tpu.dot_dimension_numbers<[2], [1], [1], [2], [0, 0, 0, 1, 1, 2], [0], [0]>} : vector<1x8x8xf32>, vector<1x8x8xf32>, vector<1x8x8xf32> -> vector<1x8x8xf32>
    "tpu.trace_stop"() : () -> ()
    %116 = tpu.concatenate %43, %67, %91, %115 in 2 : vector<1x8x8xf32>, vector<1x8x8xf32>, vector<1x8x8xf32>, vector<1x8x8xf32> -> vector<1x8x32xf32>
    %117 = vector.shape_cast %116 : vector<1x8x32xf32> to vector<8x32xf32>
    %c0_44 = arith.constant 0 : index
    %c0_45 = arith.constant 0 : index
    %118 = vector.load %arg9[%c0_44, %c0_45] : memref<32x32xf32, #tpu.memory_space<vmem>>, vector<32x32xf32>
    %cst_46 = arith.constant dense<0.000000e+00> : vector<8x32xf32>
    %119 = tpu.matmul %117, %118, %cst_46 {dimension_numbers = #tpu.dot_dimension_numbers<[1], [0], [0], [1], [0, 0, 1, 1], [], []>} : vector<8x32xf32>, vector<32x32xf32>, vector<8x32xf32> -> vector<8x32xf32>
    %c0_47 = arith.constant 0 : index
    %c0_48 = arith.constant 0 : index
    %120 = vector.load %arg10[%c0_47, %c0_48] : memref<1x32xf32, #tpu.memory_space<vmem>>, vector<1x32xf32>
    %121 = vector.broadcast %120 : vector<1x32xf32> to vector<8x32xf32>
    %122 = arith.addf %119, %121 : vector<8x32xf32>
    %123 = arith.addf %1, %122 : vector<8x32xf32>
    %c0_49 = arith.constant 0 : index
    %c0_50 = arith.constant 0 : index
    %124 = vector.load %arg15[%c0_49, %c0_50] : memref<1x32xf32, #tpu.memory_space<vmem>>, vector<1x32xf32>
    %c0_51 = arith.constant 0 : index
    %c0_52 = arith.constant 0 : index
    %125 = vector.load %arg16[%c0_51, %c0_52] : memref<1x32xf32, #tpu.memory_space<vmem>>, vector<1x32xf32>
    %cst_53 = arith.constant dense<0.000000e+00> : vector<8xf32>
    %126 = vector.multi_reduction <add>, %123, %cst_53 [1] : vector<8x32xf32> to vector<8xf32>
    %127 = vector.shape_cast %126 : vector<8xf32> to vector<8x1xf32>
    %cst_54 = arith.constant 3.200000e+01 : f32
    %128 = vector.broadcast %cst_54 : f32 to vector<8x1xf32>
    %129 = arith.divf %127, %128 : vector<8x1xf32>
    %130 = vector.broadcast %129 : vector<8x1xf32> to vector<8x32xf32>
    %131 = arith.subf %123, %130 : vector<8x32xf32>
    %132 = arith.mulf %131, %131 : vector<8x32xf32>
    %cst_55 = arith.constant dense<0.000000e+00> : vector<8xf32>
    %133 = vector.multi_reduction <add>, %132, %cst_55 [1] : vector<8x32xf32> to vector<8xf32>
    %134 = vector.shape_cast %133 : vector<8xf32> to vector<8x1xf32>
    %cst_56 = arith.constant 3.200000e+01 : f32
    %135 = vector.broadcast %cst_56 : f32 to vector<8x1xf32>
    %136 = arith.divf %134, %135 : vector<8x1xf32>
    %cst_57 = arith.constant 9.99999974E-6 : f32
    %137 = vector.broadcast %cst_57 : f32 to vector<8x1xf32>
    %138 = arith.addf %136, %137 : vector<8x1xf32>
    %139 = math.rsqrt %138 : vector<8x1xf32>
    %140 = vector.broadcast %139 : vector<8x1xf32> to vector<8x32xf32>
    %141 = arith.mulf %131, %140 : vector<8x32xf32>
    %142 = vector.broadcast %124 : vector<1x32xf32> to vector<8x32xf32>
    %143 = arith.mulf %141, %142 : vector<8x32xf32>
    %144 = vector.broadcast %125 : vector<1x32xf32> to vector<8x32xf32>
    %145 = arith.addf %143, %144 : vector<8x32xf32>
    %c0_58 = arith.constant 0 : index
    %c0_59 = arith.constant 0 : index
    %146 = vector.load %arg11[%c0_58, %c0_59] : memref<32x128xf32, #tpu.memory_space<vmem>>, vector<32x128xf32>
    %cst_60 = arith.constant dense<0.000000e+00> : vector<8x128xf32>
    %147 = tpu.matmul %145, %146, %cst_60 {dimension_numbers = #tpu.dot_dimension_numbers<[1], [0], [0], [1], [0, 0, 1, 1], [], []>} : vector<8x32xf32>, vector<32x128xf32>, vector<8x128xf32> -> vector<8x128xf32>
    %c0_61 = arith.constant 0 : index
    %c0_62 = arith.constant 0 : index
    %148 = vector.load %arg12[%c0_61, %c0_62] : memref<1x128xf32, #tpu.memory_space<vmem>>, vector<1x128xf32>
    %149 = vector.broadcast %148 : vector<1x128xf32> to vector<8x128xf32>
    %150 = arith.addf %147, %149 : vector<8x128xf32>
    %cst_63 = arith.constant 0.000000e+00 : f32
    %151 = vector.broadcast %cst_63 : f32 to vector<8x128xf32>
    %152 = arith.maximumf %150, %151 : vector<8x128xf32>
    %c0_64 = arith.constant 0 : index
    %c0_65 = arith.constant 0 : index
    %153 = vector.load %arg13[%c0_64, %c0_65] : memref<128x32xf32, #tpu.memory_space<vmem>>, vector<128x32xf32>
    %cst_66 = arith.constant dense<0.000000e+00> : vector<8x32xf32>
    %154 = tpu.matmul %152, %153, %cst_66 {dimension_numbers = #tpu.dot_dimension_numbers<[1], [0], [0], [1], [0, 0, 1, 1], [], []>} : vector<8x128xf32>, vector<128x32xf32>, vector<8x32xf32> -> vector<8x32xf32>
    %c0_67 = arith.constant 0 : index
    %c0_68 = arith.constant 0 : index
    %155 = vector.load %arg14[%c0_67, %c0_68] : memref<1x32xf32, #tpu.memory_space<vmem>>, vector<1x32xf32>
    %156 = vector.broadcast %155 : vector<1x32xf32> to vector<8x32xf32>
    %157 = arith.addf %154, %156 : vector<8x32xf32>
    %158 = arith.addf %145, %157 : vector<8x32xf32>
    %c0_69 = arith.constant 0 : index
    %c0_70 = arith.constant 0 : index
    %159 = vector.load %arg17[%c0_69, %c0_70] : memref<1x32xf32, #tpu.memory_space<vmem>>, vector<1x32xf32>
    %c0_71 = arith.constant 0 : index
    %c0_72 = arith.constant 0 : index
    %160 = vector.load %arg18[%c0_71, %c0_72] : memref<1x32xf32, #tpu.memory_space<vmem>>, vector<1x32xf32>
    %cst_73 = arith.constant dense<0.000000e+00> : vector<8xf32>
    %161 = vector.multi_reduction <add>, %158, %cst_73 [1] : vector<8x32xf32> to vector<8xf32>
    %162 = vector.shape_cast %161 : vector<8xf32> to vector<8x1xf32>
    %cst_74 = arith.constant 3.200000e+01 : f32
    %163 = vector.broadcast %cst_74 : f32 to vector<8x1xf32>
    %164 = arith.divf %162, %163 : vector<8x1xf32>
    %165 = vector.broadcast %164 : vector<8x1xf32> to vector<8x32xf32>
    %166 = arith.subf %158, %165 : vector<8x32xf32>
    %167 = arith.mulf %166, %166 : vector<8x32xf32>
    %cst_75 = arith.constant dense<0.000000e+00> : vector<8xf32>
    %168 = vector.multi_reduction <add>, %167, %cst_75 [1] : vector<8x32xf32> to vector<8xf32>
    %169 = vector.shape_cast %168 : vector<8xf32> to vector<8x1xf32>
    %cst_76 = arith.constant 3.200000e+01 : f32
    %170 = vector.broadcast %cst_76 : f32 to vector<8x1xf32>
    %171 = arith.divf %169, %170 : vector<8x1xf32>
    %cst_77 = arith.constant 9.99999974E-6 : f32
    %172 = vector.broadcast %cst_77 : f32 to vector<8x1xf32>
    %173 = arith.addf %171, %172 : vector<8x1xf32>
    %174 = math.rsqrt %173 : vector<8x1xf32>
    %175 = vector.broadcast %174 : vector<8x1xf32> to vector<8x32xf32>
    %176 = arith.mulf %166, %175 : vector<8x32xf32>
    %177 = vector.broadcast %159 : vector<1x32xf32> to vector<8x32xf32>
    %178 = arith.mulf %176, %177 : vector<8x32xf32>
    %179 = vector.broadcast %160 : vector<1x32xf32> to vector<8x32xf32>
    %180 = arith.addf %178, %179 : vector<8x32xf32>
    %181 = vector.shape_cast %180 : vector<8x32xf32> to vector<1x8x32xf32>
    %c0_78 = arith.constant 0 : index
    %c0_79 = arith.constant 0 : index
    %c0_80 = arith.constant 0 : index
    %182 = vector.load %arg19[%c0_78, %c0_79, %c0_80] : memref<1x8x32xf32, #tpu.memory_space<vmem>>, vector<1x8x32xf32>
    tpu.vector_store %arg19[%c0_78, %c0_79, %c0_80], %181 {strides = array<i32>} : memref<1x8x32xf32, #tpu.memory_space<vmem>>, vector<1x8x32xf32>,
    return
  }
  func.func @transform_0(%arg0: i32) -> (i32, i32, i32) {
    %c0_i32 = arith.constant 0 : i32
    %c0_i32_0 = arith.constant 0 : i32
    %c0_i32_1 = arith.constant 0 : i32
    return %arg0, %c0_i32, %c0_i32_0 : i32, i32, i32
  }
  func.func @transform_1(%arg0: i32) -> (i32, i32, i32) {
    %c0_i32 = arith.constant 0 : i32
    %c0_i32_0 = arith.constant 0 : i32
    %c0_i32_1 = arith.constant 0 : i32
    return %arg0, %c0_i32, %c0_i32_0 : i32, i32, i32
  }
  func.func @transform_2(%arg0: i32) -> (i32, i32) {
    %c0_i32 = arith.constant 0 : i32
    %c0_i32_0 = arith.constant 0 : i32
    %c0_i32_1 = arith.constant 0 : i32
    return %c0_i32, %c0_i32_0 : i32, i32
  }
  func.func @transform_3(%arg0: i32) -> (i32, i32) {
    %c0_i32 = arith.constant 0 : i32
    %c0_i32_0 = arith.constant 0 : i32
    %c0_i32_1 = arith.constant 0 : i32
    return %c0_i32, %c0_i32_0 : i32, i32
  }
  func.func @transform_4(%arg0: i32) -> (i32, i32) {
    %c0_i32 = arith.constant 0 : i32
    %c0_i32_0 = arith.constant 0 : i32
    %c0_i32_1 = arith.constant 0 : i32
    return %c0_i32, %c0_i32_0 : i32, i32
  }
  func.func @transform_5(%arg0: i32) -> (i32, i32) {
    %c0_i32 = arith.constant 0 : i32
    %c0_i32_0 = arith.constant 0 : i32
    %c0_i32_1 = arith.constant 0 : i32
    return %c0_i32, %c0_i32_0 : i32, i32
  }
  func.func @transform_6(%arg0: i32) -> (i32, i32) {
    %c0_i32 = arith.constant 0 : i32
    %c0_i32_0 = arith.constant 0 : i32
    %c0_i32_1 = arith.constant 0 : i32
    return %c0_i32, %c0_i32_0 : i32, i32
  }
  func.func @transform_7(%arg0: i32) -> (i32, i32) {
    %c0_i32 = arith.constant 0 : i32
    %c0_i32_0 = arith.constant 0 : i32
    %c0_i32_1 = arith.constant 0 : i32
    return %c0_i32, %c0_i32_0 : i32, i32
  }
  func.func @transform_8(%arg0: i32) -> (i32, i32) {
    %c0_i32 = arith.constant 0 : i32
    %c0_i32_0 = arith.constant 0 : i32
    %c0_i32_1 = arith.constant 0 : i32
    return %c0_i32, %c0_i32_0 : i32, i32
  }
  func.func @transform_9(%arg0: i32) -> (i32, i32) {
    %c0_i32 = arith.constant 0 : i32
    %c0_i32_0 = arith.constant 0 : i32
    %c0_i32_1 = arith.constant 0 : i32
    return %c0_i32, %c0_i32_0 : i32, i32
  }
  func.func @transform_10(%arg0: i32) -> (i32, i32) {
    %c0_i32 = arith.constant 0 : i32
    %c0_i32_0 = arith.constant 0 : i32
    %c0_i32_1 = arith.constant 0 : i32
    return %c0_i32, %c0_i32_0 : i32, i32
  }
  func.func @transform_11(%arg0: i32) -> (i32, i32) {
    %c0_i32 = arith.constant 0 : i32
    %c0_i32_0 = arith.constant 0 : i32
    %c0_i32_1 = arith.constant 0 : i32
    return %c0_i32, %c0_i32_0 : i32, i32
  }
  func.func @transform_12(%arg0: i32) -> (i32, i32) {
    %c0_i32 = arith.constant 0 : i32
    %c0_i32_0 = arith.constant 0 : i32
    %c0_i32_1 = arith.constant 0 : i32
    return %c0_i32, %c0_i32_0 : i32, i32
  }
  func.func @transform_13(%arg0: i32) -> (i32, i32) {
    %c0_i32 = arith.constant 0 : i32
    %c0_i32_0 = arith.constant 0 : i32
    %c0_i32_1 = arith.constant 0 : i32
    return %c0_i32, %c0_i32_0 : i32, i32
  }
  func.func @transform_14(%arg0: i32) -> (i32, i32) {
    %c0_i32 = arith.constant 0 : i32
    %c0_i32_0 = arith.constant 0 : i32
    %c0_i32_1 = arith.constant 0 : i32
    return %c0_i32, %c0_i32_0 : i32, i32
  }
  func.func @transform_15(%arg0: i32) -> (i32, i32) {
    %c0_i32 = arith.constant 0 : i32
    %c0_i32_0 = arith.constant 0 : i32
    %c0_i32_1 = arith.constant 0 : i32
    return %c0_i32, %c0_i32_0 : i32, i32
  }
  func.func @transform_16(%arg0: i32) -> (i32, i32) {
    %c0_i32 = arith.constant 0 : i32
    %c0_i32_0 = arith.constant 0 : i32
    %c0_i32_1 = arith.constant 0 : i32
    return %c0_i32, %c0_i32_0 : i32, i32
  }
  func.func @transform_17(%arg0: i32) -> (i32, i32) {
    %c0_i32 = arith.constant 0 : i32
    %c0_i32_0 = arith.constant 0 : i32
    %c0_i32_1 = arith.constant 0 : i32
    return %c0_i32, %c0_i32_0 : i32, i32
  }
  func.func @transform_18(%arg0: i32) -> (i32, i32, i32) {
    %c0_i32 = arith.constant 0 : i32
    %c0_i32_0 = arith.constant 0 : i32
    %c0_i32_1 = arith.constant 0 : i32
    return %arg0, %c0_i32, %c0_i32_0 : i32, i32, i32
  }
}

</mosaic_0001>

<llo_original>
// kernel: tpu_custom_call.1
$region0: #{tpu_custom_call.1}
  #allocation0 [shape = 'u32[]', space=smem, size = 0x4, offset = 0x4, fixed_abs, tag = 'smem constant byte address 0x4 - core index']
  #allocation1 [shape = 'u32[72,128]{1,0:T(1,128)}', space=vmem, size = 0x9000, scoped, tag = 'internal scratch']
  %s0 = inlined_call_operand.hbm [shape: f32[2,8,32], index: 0, kind: input, shape index: {}]
  %s1 = inlined_call_operand.hbm [shape: f32[2,1,8], index: 1, kind: input, shape index: {}]
  %s2 = inlined_call_operand.vmem [shape: f32[32,32], index: 2, kind: input, shape index: {}]
  %s3 = inlined_call_operand.vmem [shape: f32[1,32], index: 3, kind: input, shape index: {}]
  %s4 = inlined_call_operand.vmem [shape: f32[32,32], index: 4, kind: input, shape index: {}]
  %s5 = inlined_call_operand.vmem [shape: f32[1,32], index: 5, kind: input, shape index: {}]
  %s6 = inlined_call_operand.vmem [shape: f32[32,32], index: 6, kind: input, shape index: {}]
  %s7 = inlined_call_operand.vmem [shape: f32[1,32], index: 7, kind: input, shape index: {}]
  %s8 = inlined_call_operand.vmem [shape: f32[32,32], index: 8, kind: input, shape index: {}]
  %s9 = inlined_call_operand.vmem [shape: f32[1,32], index: 9, kind: input, shape index: {}]
  %s10 = inlined_call_operand.vmem [shape: f32[32,128], index: 10, kind: input, shape index: {}]
  %s11 = inlined_call_operand.vmem [shape: f32[1,128], index: 11, kind: input, shape index: {}]
  %s12 = inlined_call_operand.vmem [shape: f32[128,32], index: 12, kind: input, shape index: {}]
  %s13 = inlined_call_operand.vmem [shape: f32[1,32], index: 13, kind: input, shape index: {}]
  %s14 = inlined_call_operand.vmem [shape: f32[1,32], index: 14, kind: input, shape index: {}]
  %s15 = inlined_call_operand.vmem [shape: f32[1,32], index: 15, kind: input, shape index: {}]
  %s16 = inlined_call_operand.vmem [shape: f32[1,32], index: 16, kind: input, shape index: {}]
  %s17 = inlined_call_operand.vmem [shape: f32[1,32], index: 17, kind: input, shape index: {}]
  %s18 = inlined_call_operand.hbm [shape: f32[2,8,32], index: 18, kind: output, shape index: {}]
  %s19 = sld [smem:[#allocation0]]
  $region113: #{tpu_custom_call.1} parent=0
    _
  %s21 = ssub.s32 1, %s19
  %s22 = scalar_select 0, %s21, %s19
  $region1: #{tpu_custom_call.1} parent=0
    #allocation2 [shape = 'u8[8192]{0}', space=vmem, size = 0x2000, scoped, tag = 'input window, operand 0']
    #allocation3 [shape = 's32[2]{0}', space=sflag, size = 0x8, scoped, tag = 'scoped memory for tpu_custom_call.1']
    #allocation4 [shape = 's32[2]{0}', space=sflag, size = 0x8, scoped, tag = 'scoped memory for tpu_custom_call.1']
    #allocation5 [shape = 'u8[1024]{0}', space=vmem, size = 0x400, scoped, tag = 'input window, operand 1']
    #allocation6 [shape = 's32[2]{0}', space=sflag, size = 0x8, scoped, tag = 'scoped memory for tpu_custom_call.1']
    #allocation7 [shape = 'u8[8192]{0}', space=vmem, size = 0x2000, scoped, tag = 'output window, operand 0']
    %23 = vsyncpa [#allocation3], 0
    %s24 = scalar_lea.sflag [#allocation3], 1
    %25 = vsyncpa %s24, 0
    %26 = vsyncpa [#allocation6], 0
    %s27 = scalar_lea.sflag [#allocation6], 1
    %28 = vsyncpa %s27, 0
    %29 = vsyncpa [#allocation4], 0
    %s30 = scalar_lea.sflag [#allocation4], 1
    %31 = vsyncpa %s30, 0
    loop: start=0, step=1, limit=4
    $region2: #{tpu_custom_call.1} parent=1 // loop_pre_header
      _
    $region3: #{tpu_custom_call.1} parent=1 // loop_header
      %s33 = sphi 0, %s37
      %p34 = scmp.ge.s32.totalorder %s33, 4
      %s43 = sphi 0, %s45
      %s46 = sphi 0, %s43
      %s47 = sphi 0, %s46
      %s63 = sphi 0, %s47
      %s69 = sphi 0, %s71
      %s72 = sphi 0, %s69
      %s73 = sphi 0, %s72
      %s89 = sphi 0, %s73
      %s93 = sphi 0, %s93
      %s95 = sphi 0, %s93
      %s96 = sphi 0, %s95
      %s110 = sphi 0, %s96
      %s114 = sphi 0, %s114
      %s116 = sphi 0, %s114
      %s117 = sphi 0, %s116
      %s131 = sphi 0, %s117
      %s135 = sphi 0, %s135
      %s137 = sphi 0, %s135
      %s138 = sphi 0, %s137
      %s152 = sphi 0, %s138
      %s156 = sphi 0, %s156
      %s158 = sphi 0, %s156
      %s159 = sphi 0, %s158
      %s173 = sphi 0, %s159
      %s177 = sphi 0, %s177
      %s179 = sphi 0, %s177
      %s180 = sphi 0, %s179
      %s194 = sphi 0, %s180
      %s198 = sphi 0, %s198
      %s200 = sphi 0, %s198
      %s201 = sphi 0, %s200
      %s215 = sphi 0, %s201
      %s219 = sphi 0, %s219
      %s221 = sphi 0, %s219
      %s222 = sphi 0, %s221
      %s236 = sphi 0, %s222
      %s240 = sphi 0, %s240
      %s242 = sphi 0, %s240
      %s243 = sphi 0, %s242
      %s257 = sphi 0, %s243
      %s261 = sphi 0, %s261
      %s263 = sphi 0, %s261
      %s264 = sphi 0, %s263
      %s278 = sphi 0, %s264
      %s282 = sphi 0, %s282
      %s284 = sphi 0, %s282
      %s285 = sphi 0, %s284
      %s299 = sphi 0, %s285
      %s303 = sphi 0, %s303
      %s305 = sphi 0, %s303
      %s306 = sphi 0, %s305
      %s320 = sphi 0, %s306
      %s324 = sphi 0, %s324
      %s326 = sphi 0, %s324
      %s327 = sphi 0, %s326
      %s341 = sphi 0, %s327
      %s345 = sphi 0, %s345
      %s347 = sphi 0, %s345
      %s348 = sphi 0, %s347
      %s362 = sphi 0, %s348
      %s366 = sphi 0, %s366
      %s368 = sphi 0, %s366
      %s369 = sphi 0, %s368
      %s383 = sphi 0, %s369
      %s387 = sphi 0, %s387
      %s389 = sphi 0, %s387
      %s390 = sphi 0, %s389
      %s404 = sphi 0, %s390
      %s408 = sphi 0, %s408
      %s410 = sphi 0, %s408
      %s411 = sphi 0, %s410
      %s425 = sphi 0, %s411
      %s431 = sphi 0, %s433
      %s434 = sphi 0, %s431
      %s435 = sphi 0, %s434
      %s451 = sphi 0, %s435
    $region4: #{tpu_custom_call.1} parent=1 // loop_header_branch
      %36 = sbr.rel (%p34) target = $region8
    $region5: #{tpu_custom_call.1} parent=1 // loop_body
      %s38 = ssub.s32 %s33, 1
      %s39 = ssub.s32 %s33, 2
      %s40 = sadd.s32 %s33, 1
      %s41 = ssub.s32 %s33, %s40
      %p42 = scmp.eq.s32.totalorder %s41, 0
      %s44 = sadd.s32 %s43, 1
      %s45 = scalar_select %p42, %s43, %s44
      %p48 = pneg %p42
      %p49 = scmp.eq.s32.totalorder %s33, 1
      %p50 = por %p48, %p49
      %p51 = scmp.ne.s32.totalorder %s43, %s46
      %p52 = scmp.eq.s32.totalorder %s33, 0
      %p53 = por %p51, %p52
      %p54 = scmp.ne.s32.totalorder %s43, %s46
      %p55 = scmp.eq.s32.totalorder %s38, 1
      %p56 = por %p54, %p55
      %p57 = scmp.ne.s32.totalorder %s46, %s47
      %p58 = scmp.eq.s32.totalorder %s38, 0
      %p59 = por %p57, %p58
      %p60 = scmp.ne.s32.totalorder %s46, %s47
      %p61 = scmp.eq.s32.totalorder %s39, 1
      %p62 = por %p60, %p61
      %p64 = scmp.ne.s32.totalorder %s47, %s63
      %p65 = scmp.eq.s32.totalorder %s39, 0
      %p66 = por %p64, %p65
      %s67 = ssub.s32 %s33, %s40
      %p68 = scmp.eq.s32.totalorder %s67, 0
      %s70 = sadd.s32 %s69, 1
      %s71 = scalar_select %p68, %s69, %s70
      %p74 = pneg %p68
      %p75 = scmp.eq.s32.totalorder %s33, 1
      %p76 = por %p74, %p75
      %p77 = scmp.ne.s32.totalorder %s69, %s72
      %p78 = scmp.eq.s32.totalorder %s33, 0
      %p79 = por %p77, %p78
      %p80 = scmp.ne.s32.totalorder %s69, %s72
      %p81 = scmp.eq.s32.totalorder %s38, 1
      %p82 = por %p80, %p81
      %p83 = scmp.ne.s32.totalorder %s72, %s73
      %p84 = scmp.eq.s32.totalorder %s38, 0
      %p85 = por %p83, %p84
      %p86 = scmp.ne.s32.totalorder %s72, %s73
      %p87 = scmp.eq.s32.totalorder %s39, 1
      %p88 = por %p86, %p87
      %p90 = scmp.ne.s32.totalorder %s73, %s89
      %p91 = scmp.eq.s32.totalorder %s39, 0
      %p92 = por %p90, %p91
      %s94 = sadd.s32 %s93, 1
      %p97 = scmp.eq.s32.totalorder %s33, 1
      %p98 = scmp.ne.s32.totalorder %s93, %s95
      %p99 = scmp.eq.s32.totalorder %s33, 0
      %p100 = por %p98, %p99
      %p101 = scmp.ne.s32.totalorder %s93, %s95
      %p102 = scmp.eq.s32.totalorder %s38, 1
      %p103 = por %p101, %p102
      %p104 = scmp.ne.s32.totalorder %s95, %s96
      %p105 = scmp.eq.s32.totalorder %s38, 0
      %p106 = por %p104, %p105
      %p107 = scmp.ne.s32.totalorder %s95, %s96
      %p108 = scmp.eq.s32.totalorder %s39, 1
      %p109 = por %p107, %p108
      %p111 = scmp.ne.s32.totalorder %s96, %s110
      %p112 = scmp.eq.s32.totalorder %s39, 0
      %p113 = por %p111, %p112
      %s115 = sadd.s32 %s114, 1
      %p118 = scmp.eq.s32.totalorder %s33, 1
      %p119 = scmp.ne.s32.totalorder %s114, %s116
      %p120 = scmp.eq.s32.totalorder %s33, 0
      %p121 = por %p119, %p120
      %p122 = scmp.ne.s32.totalorder %s114, %s116
      %p123 = scmp.eq.s32.totalorder %s38, 1
      %p124 = por %p122, %p123
      %p125 = scmp.ne.s32.totalorder %s116, %s117
      %p126 = scmp.eq.s32.totalorder %s38, 0
      %p127 = por %p125, %p126
      %p128 = scmp.ne.s32.totalorder %s116, %s117
      %p129 = scmp.eq.s32.totalorder %s39, 1
      %p130 = por %p128, %p129
      %p132 = scmp.ne.s32.totalorder %s117, %s131
      %p133 = scmp.eq.s32.totalorder %s39, 0
      %p134 = por %p132, %p133
      %s136 = sadd.s32 %s135, 1
      %p139 = scmp.eq.s32.totalorder %s33, 1
      %p140 = scmp.ne.s32.totalorder %s135, %s137
      %p141 = scmp.eq.s32.totalorder %s33, 0
      %p142 = por %p140, %p141
      %p143 = scmp.ne.s32.totalorder %s135, %s137
      %p144 = scmp.eq.s32.totalorder %s38, 1
      %p145 = por %p143, %p144
      %p146 = scmp.ne.s32.totalorder %s137, %s138
      %p147 = scmp.eq.s32.totalorder %s38, 0
      %p148 = por %p146, %p147
      %p149 = scmp.ne.s32.totalorder %s137, %s138
      %p150 = scmp.eq.s32.totalorder %s39, 1
      %p151 = por %p149, %p150
      %p153 = scmp.ne.s32.totalorder %s138, %s152
      %p154 = scmp.eq.s32.totalorder %s39, 0
      %p155 = por %p153, %p154
      %s157 = sadd.s32 %s156, 1
      %p160 = scmp.eq.s32.totalorder %s33, 1
      %p161 = scmp.ne.s32.totalorder %s156, %s158
      %p162 = scmp.eq.s32.totalorder %s33, 0
      %p163 = por %p161, %p162
      %p164 = scmp.ne.s32.totalorder %s156, %s158
      %p165 = scmp.eq.s32.totalorder %s38, 1
      %p166 = por %p164, %p165
      %p167 = scmp.ne.s32.totalorder %s158, %s159
      %p168 = scmp.eq.s32.totalorder %s38, 0
      %p169 = por %p167, %p168
      %p170 = scmp.ne.s32.totalorder %s158, %s159
      %p171 = scmp.eq.s32.totalorder %s39, 1
      %p172 = por %p170, %p171
      %p174 = scmp.ne.s32.totalorder %s159, %s173
      %p175 = scmp.eq.s32.totalorder %s39, 0
      %p176 = por %p174, %p175
      %s178 = sadd.s32 %s177, 1
      %p181 = scmp.eq.s32.totalorder %s33, 1
      %p182 = scmp.ne.s32.totalorder %s177, %s179
      %p183 = scmp.eq.s32.totalorder %s33, 0
      %p184 = por %p182, %p183
      %p185 = scmp.ne.s32.totalorder %s177, %s179
      %p186 = scmp.eq.s32.totalorder %s38, 1
      %p187 = por %p185, %p186
      %p188 = scmp.ne.s32.totalorder %s179, %s180
      %p189 = scmp.eq.s32.totalorder %s38, 0
      %p190 = por %p188, %p189
      %p191 = scmp.ne.s32.totalorder %s179, %s180
      %p192 = scmp.eq.s32.totalorder %s39, 1
      %p193 = por %p191, %p192
      %p195 = scmp.ne.s32.totalorder %s180, %s194
      %p196 = scmp.eq.s32.totalorder %s39, 0
      %p197 = por %p195, %p196
      %s199 = sadd.s32 %s198, 1
      %p202 = scmp.eq.s32.totalorder %s33, 1
      %p203 = scmp.ne.s32.totalorder %s198, %s200
      %p204 = scmp.eq.s32.totalorder %s33, 0
      %p205 = por %p203, %p204
      %p206 = scmp.ne.s32.totalorder %s198, %s200
      %p207 = scmp.eq.s32.totalorder %s38, 1
      %p208 = por %p206, %p207
      %p209 = scmp.ne.s32.totalorder %s200, %s201
      %p210 = scmp.eq.s32.totalorder %s38, 0
      %p211 = por %p209, %p210
      %p212 = scmp.ne.s32.totalorder %s200, %s201
      %p213 = scmp.eq.s32.totalorder %s39, 1
      %p214 = por %p212, %p213
      %p216 = scmp.ne.s32.totalorder %s201, %s215
      %p217 = scmp.eq.s32.totalorder %s39, 0
      %p218 = por %p216, %p217
      %s220 = sadd.s32 %s219, 1
      %p223 = scmp.eq.s32.totalorder %s33, 1
      %p224 = scmp.ne.s32.totalorder %s219, %s221
      %p225 = scmp.eq.s32.totalorder %s33, 0
      %p226 = por %p224, %p225
      %p227 = scmp.ne.s32.totalorder %s219, %s221
      %p228 = scmp.eq.s32.totalorder %s38, 1
      %p229 = por %p227, %p228
      %p230 = scmp.ne.s32.totalorder %s221, %s222
      %p231 = scmp.eq.s32.totalorder %s38, 0
      %p232 = por %p230, %p231
      %p233 = scmp.ne.s32.totalorder %s221, %s222
      %p234 = scmp.eq.s32.totalorder %s39, 1
      %p235 = por %p233, %p234
      %p237 = scmp.ne.s32.totalorder %s222, %s236
      %p238 = scmp.eq.s32.totalorder %s39, 0
      %p239 = por %p237, %p238
      %s241 = sadd.s32 %s240, 1
      %p244 = scmp.eq.s32.totalorder %s33, 1
      %p245 = scmp.ne.s32.totalorder %s240, %s242
      %p246 = scmp.eq.s32.totalorder %s33, 0
      %p247 = por %p245, %p246
      %p248 = scmp.ne.s32.totalorder %s240, %s242
      %p249 = scmp.eq.s32.totalorder %s38, 1
      %p250 = por %p248, %p249
      %p251 = scmp.ne.s32.totalorder %s242, %s243
      %p252 = scmp.eq.s32.totalorder %s38, 0
      %p253 = por %p251, %p252
      %p254 = scmp.ne.s32.totalorder %s242, %s243
      %p255 = scmp.eq.s32.totalorder %s39, 1
      %p256 = por %p254, %p255
      %p258 = scmp.ne.s32.totalorder %s243, %s257
      %p259 = scmp.eq.s32.totalorder %s39, 0
      %p260 = por %p258, %p259
      %s262 = sadd.s32 %s261, 1
      %p265 = scmp.eq.s32.totalorder %s33, 1
      %p266 = scmp.ne.s32.totalorder %s261, %s263
      %p267 = scmp.eq.s32.totalorder %s33, 0
      %p268 = por %p266, %p267
      %p269 = scmp.ne.s32.totalorder %s261, %s263
      %p270 = scmp.eq.s32.totalorder %s38, 1
      %p271 = por %p269, %p270
      %p272 = scmp.ne.s32.totalorder %s263, %s264
      %p273 = scmp.eq.s32.totalorder %s38, 0
      %p274 = por %p272, %p273
      %p275 = scmp.ne.s32.totalorder %s263, %s264
      %p276 = scmp.eq.s32.totalorder %s39, 1
      %p277 = por %p275, %p276
      %p279 = scmp.ne.s32.totalorder %s264, %s278
      %p280 = scmp.eq.s32.totalorder %s39, 0
      %p281 = por %p279, %p280
      %s283 = sadd.s32 %s282, 1
      %p286 = scmp.eq.s32.totalorder %s33, 1
      %p287 = scmp.ne.s32.totalorder %s282, %s284
      %p288 = scmp.eq.s32.totalorder %s33, 0
      %p289 = por %p287, %p288
      %p290 = scmp.ne.s32.totalorder %s282, %s284
      %p291 = scmp.eq.s32.totalorder %s38, 1
      %p292 = por %p290, %p291
      %p293 = scmp.ne.s32.totalorder %s284, %s285
      %p294 = scmp.eq.s32.totalorder %s38, 0
      %p295 = por %p293, %p294
      %p296 = scmp.ne.s32.totalorder %s284, %s285
      %p297 = scmp.eq.s32.totalorder %s39, 1
      %p298 = por %p296, %p297
      %p300 = scmp.ne.s32.totalorder %s285, %s299
      %p301 = scmp.eq.s32.totalorder %s39, 0
      %p302 = por %p300, %p301
      %s304 = sadd.s32 %s303, 1
      %p307 = scmp.eq.s32.totalorder %s33, 1
      %p308 = scmp.ne.s32.totalorder %s303, %s305
      %p309 = scmp.eq.s32.totalorder %s33, 0
      %p310 = por %p308, %p309
      %p311 = scmp.ne.s32.totalorder %s303, %s305
      %p312 = scmp.eq.s32.totalorder %s38, 1
      %p313 = por %p311, %p312
      %p314 = scmp.ne.s32.totalorder %s305, %s306
      %p315 = scmp.eq.s32.totalorder %s38, 0
      %p316 = por %p314, %p315
      %p317 = scmp.ne.s32.totalorder %s305, %s306
      %p318 = scmp.eq.s32.totalorder %s39, 1
      %p319 = por %p317, %p318
      %p321 = scmp.ne.s32.totalorder %s306, %s320
      %p322 = scmp.eq.s32.totalorder %s39, 0
      %p323 = por %p321, %p322
      %s325 = sadd.s32 %s324, 1
      %p328 = scmp.eq.s32.totalorder %s33, 1
      %p329 = scmp.ne.s32.totalorder %s324, %s326
      %p330 = scmp.eq.s32.totalorder %s33, 0
      %p331 = por %p329, %p330
      %p332 = scmp.ne.s32.totalorder %s324, %s326
      %p333 = scmp.eq.s32.totalorder %s38, 1
      %p334 = por %p332, %p333
      %p335 = scmp.ne.s32.totalorder %s326, %s327
      %p336 = scmp.eq.s32.totalorder %s38, 0
      %p337 = por %p335, %p336
      %p338 = scmp.ne.s32.totalorder %s326, %s327
      %p339 = scmp.eq.s32.totalorder %s39, 1
      %p340 = por %p338, %p339
      %p342 = scmp.ne.s32.totalorder %s327, %s341
      %p343 = scmp.eq.s32.totalorder %s39, 0
      %p344 = por %p342, %p343
      %s346 = sadd.s32 %s345, 1
      %p349 = scmp.eq.s32.totalorder %s33, 1
      %p350 = scmp.ne.s32.totalorder %s345, %s347
      %p351 = scmp.eq.s32.totalorder %s33, 0
      %p352 = por %p350, %p351
      %p353 = scmp.ne.s32.totalorder %s345, %s347
      %p354 = scmp.eq.s32.totalorder %s38, 1
      %p355 = por %p353, %p354
      %p356 = scmp.ne.s32.totalorder %s347, %s348
      %p357 = scmp.eq.s32.totalorder %s38, 0
      %p358 = por %p356, %p357
      %p359 = scmp.ne.s32.totalorder %s347, %s348
      %p360 = scmp.eq.s32.totalorder %s39, 1
      %p361 = por %p359, %p360
      %p363 = scmp.ne.s32.totalorder %s348, %s362
      %p364 = scmp.eq.s32.totalorder %s39, 0
      %p365 = por %p363, %p364
      %s367 = sadd.s32 %s366, 1
      %p370 = scmp.eq.s32.totalorder %s33, 1
      %p371 = scmp.ne.s32.totalorder %s366, %s368
      %p372 = scmp.eq.s32.totalorder %s33, 0
      %p373 = por %p371, %p372
      %p374 = scmp.ne.s32.totalorder %s366, %s368
      %p375 = scmp.eq.s32.totalorder %s38, 1
      %p376 = por %p374, %p375
      %p377 = scmp.ne.s32.totalorder %s368, %s369
      %p378 = scmp.eq.s32.totalorder %s38, 0
      %p379 = por %p377, %p378
      %p380 = scmp.ne.s32.totalorder %s368, %s369
      %p381 = scmp.eq.s32.totalorder %s39, 1
      %p382 = por %p380, %p381
      %p384 = scmp.ne.s32.totalorder %s369, %s383
      %p385 = scmp.eq.s32.totalorder %s39, 0
      %p386 = por %p384, %p385
      %s388 = sadd.s32 %s387, 1
      %p391 = scmp.eq.s32.totalorder %s33, 1
      %p392 = scmp.ne.s32.totalorder %s387, %s389
      %p393 = scmp.eq.s32.totalorder %s33, 0
      %p394 = por %p392, %p393
      %p395 = scmp.ne.s32.totalorder %s387, %s389
      %p396 = scmp.eq.s32.totalorder %s38, 1
      %p397 = por %p395, %p396
      %p398 = scmp.ne.s32.totalorder %s389, %s390
      %p399 = scmp.eq.s32.totalorder %s38, 0
      %p400 = por %p398, %p399
      %p401 = scmp.ne.s32.totalorder %s389, %s390
      %p402 = scmp.eq.s32.totalorder %s39, 1
      %p403 = por %p401, %p402
      %p405 = scmp.ne.s32.totalorder %s390, %s404
      %p406 = scmp.eq.s32.totalorder %s39, 0
      %p407 = por %p405, %p406
      %s409 = sadd.s32 %s408, 1
      %p412 = scmp.eq.s32.totalorder %s33, 1
      %p413 = scmp.ne.s32.totalorder %s408, %s410
      %p414 = scmp.eq.s32.totalorder %s33, 0
      %p415 = por %p413, %p414
      %p416 = scmp.ne.s32.totalorder %s408, %s410
      %p417 = scmp.eq.s32.totalorder %s38, 1
      %p418 = por %p416, %p417
      %p419 = scmp.ne.s32.totalorder %s410, %s411
      %p420 = scmp.eq.s32.totalorder %s38, 0
      %p421 = por %p419, %p420
      %p422 = scmp.ne.s32.totalorder %s410, %s411
      %p423 = scmp.eq.s32.totalorder %s39, 1
      %p424 = por %p422, %p423
      %p426 = scmp.ne.s32.totalorder %s411, %s425
      %p427 = scmp.eq.s32.totalorder %s39, 0
      %p428 = por %p426, %p427
      %s429 = ssub.s32 %s33, %s40
      %p430 = scmp.eq.s32.totalorder %s429, 0
      %s432 = sadd.s32 %s431, 1
      %s433 = scalar_select %p430, %s431, %s432
      %p436 = pneg %p430
      %p437 = scmp.eq.s32.totalorder %s33, 1
      %p438 = por %p436, %p437
      %p439 = scmp.ne.s32.totalorder %s431, %s434
      %p440 = scmp.eq.s32.totalorder %s33, 0
      %p441 = por %p439, %p440
      %p442 = scmp.ne.s32.totalorder %s431, %s434
      %p443 = scmp.eq.s32.totalorder %s38, 1
      %p444 = por %p442, %p443
      %p445 = scmp.ne.s32.totalorder %s434, %s435
      %p446 = scmp.eq.s32.totalorder %s38, 0
      %p447 = por %p445, %p446
      %p448 = scmp.ne.s32.totalorder %s434, %s435
      %p449 = scmp.eq.s32.totalorder %s39, 1
      %p450 = por %p448, %p449
      %p452 = scmp.ne.s32.totalorder %s435, %s451
      %p453 = scmp.eq.s32.totalorder %s39, 0
      %p454 = por %p452, %p453
      %p455 = scmp.le.s32.totalorder 1, %s33
      %p456 = scmp.lt.s32.totalorder %s33, 3
      %p457 = pnand %p455, %p456
      %p458 = pneg %p457
      // Predicated region
      $region9: #{tpu_custom_call.1} parent=5 // pred_check
        _
      $region10: #{tpu_custom_call.1} parent=5 // pred_check_branch
        %460 = sbr.rel (%p457) target = $region12
      $region11: #{tpu_custom_call.1} parent=5 // pred_region
        %s461 = ssub.s32 %s33, 1
        // Predicated region
        $region13: #{tpu_custom_call.1} parent=11 // pred_check
          %p462 = pneg %p106
        $region14: #{tpu_custom_call.1} parent=11 // pred_check_branch
          %464 = sbr.rel (%p462) target = $region16
        $region15: #{tpu_custom_call.1} parent=11 // pred_region
          _
        $region16: #{tpu_custom_call.1} parent=11 // pred_fallthru
          _
        // Predicated region
        $region17: #{tpu_custom_call.1} parent=11 // pred_check
          %p465 = pneg %p127
        $region18: #{tpu_custom_call.1} parent=11 // pred_check_branch
          %467 = sbr.rel (%p465) target = $region20
        $region19: #{tpu_custom_call.1} parent=11 // pred_region
          _
        $region20: #{tpu_custom_call.1} parent=11 // pred_fallthru
          _
        // Predicated region
        $region21: #{tpu_custom_call.1} parent=11 // pred_check
          %p468 = pneg %p148
        $region22: #{tpu_custom_call.1} parent=11 // pred_check_branch
          %470 = sbr.rel (%p468) target = $region24
        $region23: #{tpu_custom_call.1} parent=11 // pred_region
          _
        $region24: #{tpu_custom_call.1} parent=11 // pred_fallthru
          _
        // Predicated region
        $region25: #{tpu_custom_call.1} parent=11 // pred_check
          %p471 = pneg %p169
        $region26: #{tpu_custom_call.1} parent=11 // pred_check_branch
          %473 = sbr.rel (%p471) target = $region28
        $region27: #{tpu_custom_call.1} parent=11 // pred_region
          _
        $region28: #{tpu_custom_call.1} parent=11 // pred_fallthru
          _
        // Predicated region
        $region29: #{tpu_custom_call.1} parent=11 // pred_check
          %p474 = pneg %p190
        $region30: #{tpu_custom_call.1} parent=11 // pred_check_branch
          %476 = sbr.rel (%p474) target = $region32
        $region31: #{tpu_custom_call.1} parent=11 // pred_region
          _
        $region32: #{tpu_custom_call.1} parent=11 // pred_fallthru
          _
        // Predicated region
        $region33: #{tpu_custom_call.1} parent=11 // pred_check
          %p477 = pneg %p211
        $region34: #{tpu_custom_call.1} parent=11 // pred_check_branch
          %479 = sbr.rel (%p477) target = $region36
        $region35: #{tpu_custom_call.1} parent=11 // pred_region
          _
        $region36: #{tpu_custom_call.1} parent=11 // pred_fallthru
          _
        // Predicated region
        $region37: #{tpu_custom_call.1} parent=11 // pred_check
          %p480 = pneg %p232
        $region38: #{tpu_custom_call.1} parent=11 // pred_check_branch
          %482 = sbr.rel (%p480) target = $region40
        $region39: #{tpu_custom_call.1} parent=11 // pred_region
          _
        $region40: #{tpu_custom_call.1} parent=11 // pred_fallthru
          _
        // Predicated region
        $region41: #{tpu_custom_call.1} parent=11 // pred_check
          %p483 = pneg %p253
        $region42: #{tpu_custom_call.1} parent=11 // pred_check_branch
          %485 = sbr.rel (%p483) target = $region44
        $region43: #{tpu_custom_call.1} parent=11 // pred_region
          _
        $region44: #{tpu_custom_call.1} parent=11 // pred_fallthru
          _
        // Predicated region
        $region45: #{tpu_custom_call.1} parent=11 // pred_check
          %p486 = pneg %p274
        $region46: #{tpu_custom_call.1} parent=11 // pred_check_branch
          %488 = sbr.rel (%p486) target = $region48
        $region47: #{tpu_custom_call.1} parent=11 // pred_region
          _
        $region48: #{tpu_custom_call.1} parent=11 // pred_fallthru
          _
        // Predicated region
        $region49: #{tpu_custom_call.1} parent=11 // pred_check
          %p489 = pneg %p295
        $region50: #{tpu_custom_call.1} parent=11 // pred_check_branch
          %491 = sbr.rel (%p489) target = $region52
        $region51: #{tpu_custom_call.1} parent=11 // pred_region
          _
        $region52: #{tpu_custom_call.1} parent=11 // pred_fallthru
          _
        // Predicated region
        $region53: #{tpu_custom_call.1} parent=11 // pred_check
          %p492 = pneg %p316
        $region54: #{tpu_custom_call.1} parent=11 // pred_check_branch
          %494 = sbr.rel (%p492) target = $region56
        $region55: #{tpu_custom_call.1} parent=11 // pred_region
          _
        $region56: #{tpu_custom_call.1} parent=11 // pred_fallthru
          _
        // Predicated region
        $region57: #{tpu_custom_call.1} parent=11 // pred_check
          %p495 = pneg %p337
        $region58: #{tpu_custom_call.1} parent=11 // pred_check_branch
          %497 = sbr.rel (%p495) target = $region60
        $region59: #{tpu_custom_call.1} parent=11 // pred_region
          _
        $region60: #{tpu_custom_call.1} parent=11 // pred_fallthru
          _
        // Predicated region
        $region61: #{tpu_custom_call.1} parent=11 // pred_check
          %p498 = pneg %p358
        $region62: #{tpu_custom_call.1} parent=11 // pred_check_branch
          %500 = sbr.rel (%p498) target = $region64
        $region63: #{tpu_custom_call.1} parent=11 // pred_region
          _
        $region64: #{tpu_custom_call.1} parent=11 // pred_fallthru
          _
        // Predicated region
        $region65: #{tpu_custom_call.1} parent=11 // pred_check
          %p501 = pneg %p379
        $region66: #{tpu_custom_call.1} parent=11 // pred_check_branch
          %503 = sbr.rel (%p501) target = $region68
        $region67: #{tpu_custom_call.1} parent=11 // pred_region
          _
        $region68: #{tpu_custom_call.1} parent=11 // pred_fallthru
          _
        // Predicated region
        $region69: #{tpu_custom_call.1} parent=11 // pred_check
          %p504 = pneg %p400
        $region70: #{tpu_custom_call.1} parent=11 // pred_check_branch
          %506 = sbr.rel (%p504) target = $region72
        $region71: #{tpu_custom_call.1} parent=11 // pred_region
          _
        $region72: #{tpu_custom_call.1} parent=11 // pred_fallthru
          _
        // Predicated region
        $region73: #{tpu_custom_call.1} parent=11 // pred_check
          %p507 = pneg %p421
        $region74: #{tpu_custom_call.1} parent=11 // pred_check_branch
          %509 = sbr.rel (%p507) target = $region76
        $region75: #{tpu_custom_call.1} parent=11 // pred_region
          _
        $region76: #{tpu_custom_call.1} parent=11 // pred_fallthru
          _
      $region12: #{tpu_custom_call.1} parent=5 // pred_fallthru
        _
      %p510 = scmp.lt.s32.totalorder %s33, 2
      // Predicated region
      $region77: #{tpu_custom_call.1} parent=5 // pred_check
        %p511 = pneg %p510
      $region78: #{tpu_custom_call.1} parent=5 // pred_check_branch
        %513 = sbr.rel (%p511) target = $region80
      $region79: #{tpu_custom_call.1} parent=5 // pred_region
        // Predicated region
        $region81: #{tpu_custom_call.1} parent=79 // pred_check
          %p514 = pneg %p53
        $region82: #{tpu_custom_call.1} parent=79 // pred_check_branch
          %516 = sbr.rel (%p514) target = $region84
        $region83: #{tpu_custom_call.1} parent=79 // pred_region
          %s517 = sand.u32 %s43, 1
          %s518 = scalar_lea.sflag [#allocation3], %s517
          %s519 = sand.u32 %s43, 1
          %s520 = smul.addr %s519, 8
          %s521 = scalar_lea.vmem [#allocation2], %s520
          %523 = vsyncadd %s518, 0
          %s524 = smul.addr %s33, 8
          %s525 = scalar_lea.hbm %s0, %s524
          %s527 = sshll.u32 %s525, 4
          %s528 = int_to_ptr.hbm [resolvable:$true] %s527
          %s529 = sshll.u32 %s521, 4
          %s530 = int_to_ptr.vmem [resolvable:$true] %s529
          %532 = dma.hbm_to_vmem [thread:$0]  %s528, 128, %s530, %s518
        $region84: #{tpu_custom_call.1} parent=79 // pred_fallthru
          _
        // Predicated region
        $region85: #{tpu_custom_call.1} parent=79 // pred_check
          %p533 = pneg %p79
        $region86: #{tpu_custom_call.1} parent=79 // pred_check_branch
          %535 = sbr.rel (%p533) target = $region88
        $region87: #{tpu_custom_call.1} parent=79 // pred_region
          %s536 = sand.u32 %s69, 1
          %s537 = scalar_lea.sflag [#allocation6], %s536
          %s538 = sand.u32 %s69, 1
          %s539 = scalar_lea.vmem [#allocation5], %s538
          %541 = vsyncadd %s537, 0
          %s542 = scalar_lea.hbm %s1, %s33
          %s544 = sshll.u32 %s542, 4
          %s545 = int_to_ptr.hbm [resolvable:$true] %s544
          %s546 = sshll.u32 %s539, 4
          %s547 = int_to_ptr.vmem [resolvable:$true] %s546
          %549 = dma.hbm_to_vmem [thread:$0]  %s545, 16, %s547, %s537
        $region88: #{tpu_custom_call.1} parent=79 // pred_fallthru
          _
      $region80: #{tpu_custom_call.1} parent=5 // pred_fallthru
        _
      %p550 = scmp.le.s32.totalorder 1, %s33
      %p551 = scmp.lt.s32.totalorder %s33, 3
      %p552 = pnand %p550, %p551
      %p553 = pneg %p552
      // Predicated region
      $region89: #{tpu_custom_call.1} parent=5 // pred_check
        _
      $region90: #{tpu_custom_call.1} parent=5 // pred_check_branch
        %555 = sbr.rel (%p552) target = $region92
      $region91: #{tpu_custom_call.1} parent=5 // pred_region
        %s556 = ssub.s32 %s33, 1
        %s557 = sand.u32 %s46, 1
        %s558 = scalar_lea.sflag [#allocation3], %s557
        %s559 = sand.u32 %s46, 1
        %s560 = smul.addr %s559, 8
        %s561 = scalar_lea.vmem [#allocation2], %s560
        // Predicated region
        $region93: #{tpu_custom_call.1} parent=91 // pred_check
          %p562 = pneg %p59
        $region94: #{tpu_custom_call.1} parent=91 // pred_check_branch
          %564 = sbr.rel (%p562) target = $region96
        $region95: #{tpu_custom_call.1} parent=91 // pred_region
          %566 = dma.done %s558, 128
        $region96: #{tpu_custom_call.1} parent=91 // pred_fallthru
          _
        %s567 = sand.u32 %s72, 1
        %s568 = scalar_lea.sflag [#allocation6], %s567
        %s569 = sand.u32 %s72, 1
        %s570 = scalar_lea.vmem [#allocation5], %s569
        // Predicated region
        $region97: #{tpu_custom_call.1} parent=91 // pred_check
          %p571 = pneg %p85
        $region98: #{tpu_custom_call.1} parent=91 // pred_check_branch
          %573 = sbr.rel (%p571) target = $region100
        $region99: #{tpu_custom_call.1} parent=91 // pred_region
          %575 = dma.done %s568, 16
        $region100: #{tpu_custom_call.1} parent=91 // pred_fallthru
          _
        %s576 = sand.u32 %s46, 1
        %s577 = scalar_lea.sflag [#allocation3], %s576
        %s578 = sand.u32 %s46, 1
        %s579 = smul.addr %s578, 8
        %s580 = scalar_lea.vmem [#allocation2], %s579
        %p581 = pneg %p59
        %p582 = pneg %p56
        %s583 = sand.u32 %s72, 1
        %s584 = scalar_lea.sflag [#allocation6], %s583
        %s585 = sand.u32 %s72, 1
        %s586 = scalar_lea.vmem [#allocation5], %s585
        %p587 = pneg %p85
        %p588 = pneg %p82
        %p589 = pneg %p106
        %p590 = pneg %p103
        %p591 = pneg %p127
        %p592 = pneg %p124
        %p593 = pneg %p148
        %p594 = pneg %p145
        %p595 = pneg %p169
        %p596 = pneg %p166
        %p597 = pneg %p190
        %p598 = pneg %p187
        %p599 = pneg %p211
        %p600 = pneg %p208
        %p601 = pneg %p232
        %p602 = pneg %p229
        %p603 = pneg %p253
        %p604 = pneg %p250
        %p605 = pneg %p274
        %p606 = pneg %p271
        %p607 = pneg %p295
        %p608 = pneg %p292
        %p609 = pneg %p316
        %p610 = pneg %p313
        %p611 = pneg %p337
        %p612 = pneg %p334
        %p613 = pneg %p358
        %p614 = pneg %p355
        %p615 = pneg %p379
        %p616 = pneg %p376
        %p617 = pneg %p400
        %p618 = pneg %p397
        %p619 = pneg %p421
        %p620 = pneg %p418
        %p621 = pneg %p447
        %p622 = pneg %p444
        %s623 = sand.u32 %s434, 1
        %s624 = scalar_lea.sflag [#allocation4], %s623
        %s625 = sand.u32 %s434, 1
        %s626 = smul.addr %s625, 8
        %s627 = scalar_lea.vmem [#allocation7], %s626
        %v628 = vld [vmem:[%s561] sm:$0xff]
        %v629 = vld [vmem:[%s2] sm:$0xff]
        %v630 = vld [vmem:[%s2 + $0x8] sm:$0xff]
        %v631 = vld [vmem:[%s2 + $0x10] sm:$0xff]
        %v632 = vld [vmem:[%s2 + $0x18] sm:$0xff]
        %v633 = vld [vmem:[%s3] sm:$0x1]
        %v635 = vperm.slane %v633, 0
        %vm637 = vcmask 261120
        %v639 = vsel %vm637, %v628, 0
        %641 = vmatpush.msra.mxu0 0.0
        %642 = vmatpush.msra.mxu0 0.0
        %643 = vmatpush.msra.mxu0 0.0
        %644 = vmatpush.msra.mxu0 0.0
        %645 = vmatpush.msra.mxu0 0.0
        %646 = vmatpush.msra.mxu0 0.0
        %647 = vmatpush.msra.mxu0 0.0
        %648 = vmatpush.msra.mxu0 0.0
        %649 = vmatpush.msra.mxu0 0.0
        %650 = vmatpush.msra.mxu0 0.0
        %651 = vmatpush.msra.mxu0 0.0
        %652 = vmatpush.msra.mxu0 0.0
        %653 = vmatpush.msra.mxu0 %v632
        %654 = vmatpush.msra.mxu0 %v631
        %655 = vmatpush.msra.mxu0 %v630
        %656 = vmatpush.msra.mxu0 %v629
        %657 = vmatmul.f32.gmra.mxu0 %v639
        %v658 = vpop.f32.mrf.mxu0
        %v659 = vadd.f32 %v635, %v658
        %660 = vdwg.mxu0
        %v661 = vld [vmem:[%s4] sm:$0xff]
        %v662 = vld [vmem:[%s4 + $0x8] sm:$0xff]
        %v663 = vld [vmem:[%s4 + $0x10] sm:$0xff]
        %v664 = vld [vmem:[%s4 + $0x18] sm:$0xff]
        %v665 = vld [vmem:[%s5] sm:$0x1]
        %v667 = vperm.slane %v665, 0
        %669 = vmatpush.msra.mxu0 0.0
        %670 = vmatpush.msra.mxu0 0.0
        %671 = vmatpush.msra.mxu0 0.0
        %672 = vmatpush.msra.mxu0 0.0
        %673 = vmatpush.msra.mxu0 0.0
        %674 = vmatpush.msra.mxu0 0.0
        %675 = vmatpush.msra.mxu0 0.0
        %676 = vmatpush.msra.mxu0 0.0
        %677 = vmatpush.msra.mxu0 0.0
        %678 = vmatpush.msra.mxu0 0.0
        %679 = vmatpush.msra.mxu0 0.0
        %680 = vmatpush.msra.mxu0 0.0
        %681 = vmatpush.msra.mxu0 %v664
        %682 = vmatpush.msra.mxu0 %v663
        %683 = vmatpush.msra.mxu0 %v662
        %684 = vmatpush.msra.mxu0 %v661
        %685 = vmatmul.f32.gmra.mxu0 %v639
        %v686 = vpop.f32.mrf.mxu0
        %v687 = vadd.f32 %v667, %v686
        %688 = vdwg.mxu0
        %v689 = vld [vmem:[%s6] sm:$0xff]
        %v690 = vld [vmem:[%s6 + $0x8] sm:$0xff]
        %v691 = vld [vmem:[%s6 + $0x10] sm:$0xff]
        %v692 = vld [vmem:[%s6 + $0x18] sm:$0xff]
        %v693 = vld [vmem:[%s7] sm:$0x1]
        %v695 = vperm.slane %v693, 0
        %697 = vmatpush.msra.mxu0 0.0
        %698 = vmatpush.msra.mxu0 0.0
        %699 = vmatpush.msra.mxu0 0.0
        %700 = vmatpush.msra.mxu0 0.0
        %701 = vmatpush.msra.mxu0 0.0
        %702 = vmatpush.msra.mxu0 0.0
        %703 = vmatpush.msra.mxu0 0.0
        %704 = vmatpush.msra.mxu0 0.0
        %705 = vmatpush.msra.mxu0 0.0
        %706 = vmatpush.msra.mxu0 0.0
        %707 = vmatpush.msra.mxu0 0.0
        %708 = vmatpush.msra.mxu0 0.0
        %709 = vmatpush.msra.mxu0 %v692
        %710 = vmatpush.msra.mxu0 %v691
        %711 = vmatpush.msra.mxu0 %v690
        %712 = vmatpush.msra.mxu0 %v689
        %713 = vmatmul.f32.gmra.mxu0 %v639
        %v714 = vpop.f32.mrf.mxu0
        %v715 = vadd.f32 %v695, %v714
        %716 = vdwg.mxu0
        %v717 = vld [vmem:[%s570] sm:$0x1]
        %vm718 = vcmp.gt.f32.partialorder %v717, 0.5
        %vm719 = vcmask 64512
        %v721 = vsel %vm719, %v659, 0
        %v724 = vsel %vm719, %v687, 0
        %726 = vmatpush.xpose.msra.mxu0 0.0
        %727 = vmatpush.xpose.msra.mxu0 0.0
        %728 = vmatpush.xpose.msra.mxu0 0.0
        %729 = vmatpush.xpose.msra.mxu0 0.0
        %730 = vmatpush.xpose.msra.mxu0 0.0
        %731 = vmatpush.xpose.msra.mxu0 0.0
        %732 = vmatpush.xpose.msra.mxu0 0.0
        %733 = vmatpush.xpose.msra.mxu0 0.0
        %734 = vmatpush.xpose.msra.mxu0 0.0
        %735 = vmatpush.xpose.msra.mxu0 0.0
        %736 = vmatpush.xpose.msra.mxu0 0.0
        %737 = vmatpush.xpose.msra.mxu0 0.0
        %738 = vmatpush.xpose.msra.mxu0 0.0
        %739 = vmatpush.xpose.msra.mxu0 0.0
        %740 = vmatpush.xpose.msra.mxu0 0.0
        %741 = vmatpush.xpose.msra.mxu0 %v724
        %742 = vmatmul.f32.gmra.mxu0 %v721
        %v743 = vpop.f32.mrf.mxu0
        %v744 = vadd.f32 0.0, %v743
        %745 = vdwg.mxu0
        %v746 = vmul.f32 %v744, 0.35355338
        %v747 = vsel %vm718, 1, 0
        %v748 = vperm.slane %v747, 0
        %vm749 = vcmp.eq.s32.totalorder %v748, 1
        %v750 = vsel %vm749, -1e+09, %v746
        %v751 = vsel %vm719, %v750, -inf
        %752 = vmax.xlane.f32.xlu0 %v751
        %v753 = vpop.xlane.xlu0 %752
        %v754 = vsub.f32 %v750, %v753
        %v755 = vmul.f32 %v754, 1.442695
        %v756 = vpow.pop %v755
        %v757 = vsel %vm719, %v756, 0.0
        %758 = vadd.xlane.f32.xlu0 %v757
        %v759 = vpop.xlane.xlu0 %758
        %v760 = vrcp.pop %v759
        %v761 = vmul.f32 %v759, %v760
        %v762 = vsub.f32 1.0, %v761
        %v763 = vmul.f32 %v760, %v762
        %v764 = vadd.f32 %v760, %v763
        %vm765 = vweird.f32 %v759
        %vm766 = vweird.f32 %v760
        %vm767 = vmor %vm765, %vm766
        %v768 = vsel %vm767, %v760, %v764
        %v769 = vand.u32 2147483647, %v759
        %vm770 = vcmp.eq.f32.partialorder %v769, 8.507059e+37
        %v771 = vand.u32 %v759, 2147483648
        %v772 = vor.u32 1.1754944e-38, %v771
        %v773 = vsel %vm770, %v772, %v768
        %v774 = vmul.f32 %v756, %v773
        %v776 = vsel %vm719, %v774, 0
        %778 = vmatpush.msra.mxu0 0.0
        %779 = vmatpush.msra.mxu0 0.0
        %780 = vmatpush.msra.mxu0 0.0
        %781 = vmatpush.msra.mxu0 0.0
        %782 = vmatpush.msra.mxu0 0.0
        %783 = vmatpush.msra.mxu0 0.0
        %784 = vmatpush.msra.mxu0 0.0
        %785 = vmatpush.msra.mxu0 0.0
        %786 = vmatpush.msra.mxu0 0.0
        %787 = vmatpush.msra.mxu0 0.0
        %788 = vmatpush.msra.mxu0 0.0
        %789 = vmatpush.msra.mxu0 0.0
        %790 = vmatpush.msra.mxu0 0.0
        %791 = vmatpush.msra.mxu0 0.0
        %792 = vmatpush.msra.mxu0 0.0
        %793 = vmatpush.msra.mxu0 %v715
        %794 = vmatmul.f32.gmra.mxu0 %v776
        %v795 = vpop.f32.mrf.mxu0
        %v796 = vadd.f32 0.0, %v795
        %797 = vdwg.mxu0
        %798 = vrot.lane.b32.xlu0 %v659, 120
        %v799 = vpop.permute.xlu0 %798
        %800 = vrot.lane.b32.xlu0 %v687, 120
        %v801 = vpop.permute.xlu0 %800
        %v802 = vsel %vm719, %v799, 0
        %v804 = vsel %vm719, %v801, 0
        %806 = vmatpush.xpose.msra.mxu0 0.0
        %807 = vmatpush.xpose.msra.mxu0 0.0
        %808 = vmatpush.xpose.msra.mxu0 0.0
        %809 = vmatpush.xpose.msra.mxu0 0.0
        %810 = vmatpush.xpose.msra.mxu0 0.0
        %811 = vmatpush.xpose.msra.mxu0 0.0
        %812 = vmatpush.xpose.msra.mxu0 0.0
        %813 = vmatpush.xpose.msra.mxu0 0.0
        %814 = vmatpush.xpose.msra.mxu0 0.0
        %815 = vmatpush.xpose.msra.mxu0 0.0
        %816 = vmatpush.xpose.msra.mxu0 0.0
        %817 = vmatpush.xpose.msra.mxu0 0.0
        %818 = vmatpush.xpose.msra.mxu0 0.0
        %819 = vmatpush.xpose.msra.mxu0 0.0
        %820 = vmatpush.xpose.msra.mxu0 0.0
        %821 = vmatpush.xpose.msra.mxu0 %v804
        %822 = vmatmul.f32.gmra.mxu0 %v802
        %v823 = vpop.f32.mrf.mxu0
        %v824 = vadd.f32 0.0, %v823
        %825 = vdwg.mxu0
        %v826 = vmul.f32 %v824, 0.35355338
        %v827 = vsel %vm749, -1e+09, %v826
        %v828 = vsel %vm719, %v827, -inf
        %829 = vmax.xlane.f32.xlu0 %v828
        %v830 = vpop.xlane.xlu0 %829
        %v831 = vsub.f32 %v827, %v830
        %v832 = vmul.f32 %v831, 1.442695
        %v833 = vpow.pop %v832
        %v834 = vsel %vm719, %v833, 0.0
        %835 = vadd.xlane.f32.xlu0 %v834
        %v836 = vpop.xlane.xlu0 %835
        %v837 = vrcp.pop %v836
        %v838 = vmul.f32 %v836, %v837
        %v839 = vsub.f32 1.0, %v838
        %v840 = vmul.f32 %v837, %v839
        %v841 = vadd.f32 %v837, %v840
        %vm842 = vweird.f32 %v836
        %vm843 = vweird.f32 %v837
        %vm844 = vmor %vm842, %vm843
        %v845 = vsel %vm844, %v837, %v841
        %v846 = vand.u32 2147483647, %v836
        %vm847 = vcmp.eq.f32.partialorder %v846, 8.507059e+37
        %v848 = vand.u32 %v836, 2147483648
        %v849 = vor.u32 1.1754944e-38, %v848
        %v850 = vsel %vm847, %v849, %v845
        %v851 = vmul.f32 %v833, %v850
        %853 = vrot.lane.b32.xlu0 %v715, 120
        %v854 = vpop.permute.xlu0 %853
        %v857 = vsel %vm719, %v851, 0
        %859 = vmatpush.msra.mxu0 0.0
        %860 = vmatpush.msra.mxu0 0.0
        %861 = vmatpush.msra.mxu0 0.0
        %862 = vmatpush.msra.mxu0 0.0
        %863 = vmatpush.msra.mxu0 0.0
        %864 = vmatpush.msra.mxu0 0.0
        %865 = vmatpush.msra.mxu0 0.0
        %866 = vmatpush.msra.mxu0 0.0
        %867 = vmatpush.msra.mxu0 0.0
        %868 = vmatpush.msra.mxu0 0.0
        %869 = vmatpush.msra.mxu0 0.0
        %870 = vmatpush.msra.mxu0 0.0
        %871 = vmatpush.msra.mxu0 0.0
        %872 = vmatpush.msra.mxu0 0.0
        %873 = vmatpush.msra.mxu0 0.0
        %874 = vmatpush.msra.mxu0 %v854
        %875 = vmatmul.f32.gmra.mxu0 %v857
        %v876 = vpop.f32.mrf.mxu0
        %v877 = vadd.f32 0.0, %v876
        %878 = vdwg.mxu0
        %879 = vrot.lane.b32.xlu0 %v659, 112
        %v880 = vpop.permute.xlu0 %879
        %881 = vrot.lane.b32.xlu0 %v687, 112
        %v882 = vpop.permute.xlu0 %881
        %v883 = vsel %vm719, %v880, 0
        %v885 = vsel %vm719, %v882, 0
        %887 = vmatpush.xpose.msra.mxu0 0.0
        %888 = vmatpush.xpose.msra.mxu0 0.0
        %889 = vmatpush.xpose.msra.mxu0 0.0
        %890 = vmatpush.xpose.msra.mxu0 0.0
        %891 = vmatpush.xpose.msra.mxu0 0.0
        %892 = vmatpush.xpose.msra.mxu0 0.0
        %893 = vmatpush.xpose.msra.mxu0 0.0
        %894 = vmatpush.xpose.msra.mxu0 0.0
        %895 = vmatpush.xpose.msra.mxu0 0.0
        %896 = vmatpush.xpose.msra.mxu0 0.0
        %897 = vmatpush.xpose.msra.mxu0 0.0
        %898 = vmatpush.xpose.msra.mxu0 0.0
        %899 = vmatpush.xpose.msra.mxu0 0.0
        %900 = vmatpush.xpose.msra.mxu0 0.0
        %901 = vmatpush.xpose.msra.mxu0 0.0
        %902 = vmatpush.xpose.msra.mxu0 %v885
        %903 = vmatmul.f32.gmra.mxu0 %v883
        %v904 = vpop.f32.mrf.mxu0
        %v905 = vadd.f32 0.0, %v904
        %906 = vdwg.mxu0
        %v907 = vmul.f32 %v905, 0.35355338
        %v908 = vsel %vm749, -1e+09, %v907
        %v909 = vsel %vm719, %v908, -inf
        %910 = vmax.xlane.f32.xlu0 %v909
        %v911 = vpop.xlane.xlu0 %910
        %v912 = vsub.f32 %v908, %v911
        %v913 = vmul.f32 %v912, 1.442695
        %v914 = vpow.pop %v913
        %v915 = vsel %vm719, %v914, 0.0
        %916 = vadd.xlane.f32.xlu0 %v915
        %v917 = vpop.xlane.xlu0 %916
        %v918 = vrcp.pop %v917
        %v919 = vmul.f32 %v917, %v918
        %v920 = vsub.f32 1.0, %v919
        %v921 = vmul.f32 %v918, %v920
        %v922 = vadd.f32 %v918, %v921
        %vm923 = vweird.f32 %v917
        %vm924 = vweird.f32 %v918
        %vm925 = vmor %vm923, %vm924
        %v926 = vsel %vm925, %v918, %v922
        %v927 = vand.u32 2147483647, %v917
        %vm928 = vcmp.eq.f32.partialorder %v927, 8.507059e+37
        %v929 = vand.u32 %v917, 2147483648
        %v930 = vor.u32 1.1754944e-38, %v929
        %v931 = vsel %vm928, %v930, %v926
        %v932 = vmul.f32 %v914, %v931
        %933 = vrot.lane.b32.xlu0 %v715, 112
        %v934 = vpop.permute.xlu0 %933
        %v937 = vsel %vm719, %v932, 0
        %939 = vmatpush.msra.mxu0 0.0
        %940 = vmatpush.msra.mxu0 0.0
        %941 = vmatpush.msra.mxu0 0.0
        %942 = vmatpush.msra.mxu0 0.0
        %943 = vmatpush.msra.mxu0 0.0
        %944 = vmatpush.msra.mxu0 0.0
        %945 = vmatpush.msra.mxu0 0.0
        %946 = vmatpush.msra.mxu0 0.0
        %947 = vmatpush.msra.mxu0 0.0
        %948 = vmatpush.msra.mxu0 0.0
        %949 = vmatpush.msra.mxu0 0.0
        %950 = vmatpush.msra.mxu0 0.0
        %951 = vmatpush.msra.mxu0 0.0
        %952 = vmatpush.msra.mxu0 0.0
        %953 = vmatpush.msra.mxu0 0.0
        %954 = vmatpush.msra.mxu0 %v934
        %955 = vmatmul.f32.gmra.mxu0 %v937
        %v956 = vpop.f32.mrf.mxu0
        %v957 = vadd.f32 0.0, %v956
        %958 = vdwg.mxu0
        %959 = vrot.lane.b32.xlu0 %v659, 104
        %v960 = vpop.permute.xlu0 %959
        %961 = vrot.lane.b32.xlu0 %v687, 104
        %v962 = vpop.permute.xlu0 %961
        %v963 = vsel %vm719, %v960, 0
        %v965 = vsel %vm719, %v962, 0
        %967 = vmatpush.xpose.msra.mxu0 0.0
        %968 = vmatpush.xpose.msra.mxu0 0.0
        %969 = vmatpush.xpose.msra.mxu0 0.0
        %970 = vmatpush.xpose.msra.mxu0 0.0
        %971 = vmatpush.xpose.msra.mxu0 0.0
        %972 = vmatpush.xpose.msra.mxu0 0.0
        %973 = vmatpush.xpose.msra.mxu0 0.0
        %974 = vmatpush.xpose.msra.mxu0 0.0
        %975 = vmatpush.xpose.msra.mxu0 0.0
        %976 = vmatpush.xpose.msra.mxu0 0.0
        %977 = vmatpush.xpose.msra.mxu0 0.0
        %978 = vmatpush.xpose.msra.mxu0 0.0
        %979 = vmatpush.xpose.msra.mxu0 0.0
        %980 = vmatpush.xpose.msra.mxu0 0.0
        %981 = vmatpush.xpose.msra.mxu0 0.0
        %982 = vmatpush.xpose.msra.mxu0 %v965
        %983 = vmatmul.f32.gmra.mxu0 %v963
        %v984 = vpop.f32.mrf.mxu0
        %v985 = vadd.f32 0.0, %v984
        %986 = vdwg.mxu0
        %v987 = vmul.f32 %v985, 0.35355338
        %v988 = vsel %vm749, -1e+09, %v987
        %v989 = vsel %vm719, %v988, -inf
        %990 = vmax.xlane.f32.xlu0 %v989
        %v991 = vpop.xlane.xlu0 %990
        %v992 = vsub.f32 %v988, %v991
        %v993 = vmul.f32 %v992, 1.442695
        %v994 = vpow.pop %v993
        %v995 = vsel %vm719, %v994, 0.0
        %996 = vadd.xlane.f32.xlu0 %v995
        %v997 = vpop.xlane.xlu0 %996
        %v998 = vrcp.pop %v997
        %v999 = vmul.f32 %v997, %v998
        %v1000 = vsub.f32 1.0, %v999
        %v1001 = vmul.f32 %v998, %v1000
        %v1002 = vadd.f32 %v998, %v1001
        %vm1003 = vweird.f32 %v997
        %vm1004 = vweird.f32 %v998
        %vm1005 = vmor %vm1003, %vm1004
        %v1006 = vsel %vm1005, %v998, %v1002
        %v1007 = vand.u32 2147483647, %v997
        %vm1008 = vcmp.eq.f32.partialorder %v1007, 8.507059e+37
        %v1009 = vand.u32 %v997, 2147483648
        %v1010 = vor.u32 1.1754944e-38, %v1009
        %v1011 = vsel %vm1008, %v1010, %v1006
        %v1012 = vmul.f32 %v994, %v1011
        %1013 = vrot.lane.b32.xlu0 %v715, 104
        %v1014 = vpop.permute.xlu0 %1013
        %v1017 = vsel %vm719, %v1012, 0
        %1019 = vmatpush.msra.mxu0 0.0
        %1020 = vmatpush.msra.mxu0 0.0
        %1021 = vmatpush.msra.mxu0 0.0
        %1022 = vmatpush.msra.mxu0 0.0
        %1023 = vmatpush.msra.mxu0 0.0
        %1024 = vmatpush.msra.mxu0 0.0
        %1025 = vmatpush.msra.mxu0 0.0
        %1026 = vmatpush.msra.mxu0 0.0
        %1027 = vmatpush.msra.mxu0 0.0
        %1028 = vmatpush.msra.mxu0 0.0
        %1029 = vmatpush.msra.mxu0 0.0
        %1030 = vmatpush.msra.mxu0 0.0
        %1031 = vmatpush.msra.mxu0 0.0
        %1032 = vmatpush.msra.mxu0 0.0
        %1033 = vmatpush.msra.mxu0 0.0
        %1034 = vmatpush.msra.mxu0 %v1014
        %1035 = vmatmul.f32.gmra.mxu0 %v1017
        %v1036 = vpop.f32.mrf.mxu0
        %v1037 = vadd.f32 0.0, %v1036
        %1038 = vdwg.mxu0
        %1040 = vrot.lane.b32.xlu0 %v877, 8
        %v1041 = vpop.permute.xlu0 %1040
        %1044 = vrot.lane.b32.xlu0 %v957, 16
        %v1045 = vpop.permute.xlu0 %1044
        %1048 = vrot.lane.b32.xlu0 %v1037, 24
        %v1049 = vpop.permute.xlu0 %1048
        %v1051 = vsel %vm719, %v796, %v1041
        %vm1052 = vcmask 130048
        %v1053 = vsel %vm1052, %v1051, %v1045
        %vm1054 = vcmask 195584
        %v1055 = vsel %vm1054, %v1053, %v1049
        %v1056 = vld [vmem:[%s8] sm:$0xff]
        %v1057 = vld [vmem:[%s8 + $0x8] sm:$0xff]
        %v1058 = vld [vmem:[%s8 + $0x10] sm:$0xff]
        %v1059 = vld [vmem:[%s8 + $0x18] sm:$0xff]
        %v1060 = vld [vmem:[%s9] sm:$0x1]
        %v1062 = vperm.slane %v1060, 0
        %v1065 = vsel %vm637, %v1055, 0
        %1067 = vmatpush.msra.mxu0 0.0
        %1068 = vmatpush.msra.mxu0 0.0
        %1069 = vmatpush.msra.mxu0 0.0
        %1070 = vmatpush.msra.mxu0 0.0
        %1071 = vmatpush.msra.mxu0 0.0
        %1072 = vmatpush.msra.mxu0 0.0
        %1073 = vmatpush.msra.mxu0 0.0
        %1074 = vmatpush.msra.mxu0 0.0
        %1075 = vmatpush.msra.mxu0 0.0
        %1076 = vmatpush.msra.mxu0 0.0
        %1077 = vmatpush.msra.mxu0 0.0
        %1078 = vmatpush.msra.mxu0 0.0
        %1079 = vmatpush.msra.mxu0 %v1059
        %1080 = vmatpush.msra.mxu0 %v1058
        %1081 = vmatpush.msra.mxu0 %v1057
        %1082 = vmatpush.msra.mxu0 %v1056
        %1083 = vmatmul.f32.gmra.mxu0 %v1065
        %v1084 = vpop.f32.mrf.mxu0
        %v1085 = vadd.f32 %v1062, %v1084
        %1086 = vdwg.mxu0
        %v1087 = vadd.f32 %v628, %v1085
        %v1088 = vld [vmem:[%s14] sm:$0x1]
        %v1089 = vld [vmem:[%s15] sm:$0x1]
        %v1090 = vsel %vm637, %v1087, 0.0
        %1091 = vadd.xlane.f32.xlu0 %v1090
        %v1092 = vpop.xlane.xlu0 %1091
        %v1093 = vrcp.pop 32.0
        %v1094 = vmul.f32 32.0, %v1093
        %v1095 = vsub.f32 1.0, %v1094
        %v1096 = vmul.f32 %v1093, %v1095
        %v1097 = vadd.f32 %v1093, %v1096
        %vm1098 = vweird.f32 %v1093
        %v1099 = vsel %vm1098, %v1093, %v1097
        %v1100 = vmul.f32 %v1092, %v1099
        %v1101 = vsub.f32 %v1087, %v1100
        %v1102 = vmul.f32 %v1101, %v1101
        %v1103 = vsel %vm637, %v1102, 0.0
        %1104 = vadd.xlane.f32.xlu0 %v1103
        %v1105 = vpop.xlane.xlu0 %1104
        %v1106 = vmul.f32 %v1105, %v1099
        %v1107 = vadd.f32 %v1106, 1e-05
        %v1108 = vrsqrt.pop %v1107
        %v1109 = vmul.f32 %v1108, %v1107
        %v1110 = vmul.f32 %v1109, %v1108
        %v1111 = vmul.f32 0.5, %v1110
        %v1112 = vsub.f32 1.5, %v1111
        %v1113 = vmul.f32 %v1108, %v1112
        %vm1114 = vweird.f32 %v1107
        %vm1115 = vweird.f32 %v1108
        %vm1116 = vmor %vm1114, %vm1115
        %v1117 = vsel %vm1116, %v1108, %v1113
        %v1118 = vmul.f32 %v1101, %v1117
        %v1120 = vperm.slane %v1088, 0
        %v1122 = vmul.f32 %v1118, %v1120
        %v1124 = vperm.slane %v1089, 0
        %v1126 = vadd.f32 %v1122, %v1124
        %v1127 = vld [vmem:[%s10] sm:$0xff]
        %v1128 = vld [vmem:[%s10 + $0x8] sm:$0xff]
        %v1129 = vld [vmem:[%s10 + $0x10] sm:$0xff]
        %v1130 = vld [vmem:[%s10 + $0x18] sm:$0xff]
        %v1131 = vld [vmem:[%s11] sm:$0x1]
        %v1133 = vperm.slane %v1131, 0
        %v1136 = vsel %vm637, %v1126, 0
        %1138 = vmatpush.msra.mxu0 0.0
        %1139 = vmatpush.msra.mxu0 0.0
        %1140 = vmatpush.msra.mxu0 0.0
        %1141 = vmatpush.msra.mxu0 0.0
        %1142 = vmatpush.msra.mxu0 0.0
        %1143 = vmatpush.msra.mxu0 0.0
        %1144 = vmatpush.msra.mxu0 0.0
        %1145 = vmatpush.msra.mxu0 0.0
        %1146 = vmatpush.msra.mxu0 0.0
        %1147 = vmatpush.msra.mxu0 0.0
        %1148 = vmatpush.msra.mxu0 0.0
        %1149 = vmatpush.msra.mxu0 0.0
        %1150 = vmatpush.msra.mxu0 %v1130
        %1151 = vmatpush.msra.mxu0 %v1129
        %1152 = vmatpush.msra.mxu0 %v1128
        %1153 = vmatpush.msra.mxu0 %v1127
        %1154 = vmatmul.f32.gmra.mxu0 %v1136
        %v1155 = vpop.f32.mrf.mxu0
        %v1156 = vadd.f32 %v1133, %v1155
        %1157 = vdwg.mxu0
        %v1158 = vmax.f32 %v1156, 0.0
        %v1159 = vld [vmem:[%s12] sm:$0xff]
        %v1160 = vld [vmem:[%s12 + $0x8] sm:$0xff]
        %v1161 = vld [vmem:[%s12 + $0x10] sm:$0xff]
        %v1162 = vld [vmem:[%s12 + $0x18] sm:$0xff]
        %v1163 = vld [vmem:[%s12 + $0x20] sm:$0xff]
        %v1164 = vld [vmem:[%s12 + $0x28] sm:$0xff]
        %v1165 = vld [vmem:[%s12 + $0x30] sm:$0xff]
        %v1166 = vld [vmem:[%s12 + $0x38] sm:$0xff]
        %v1167 = vld [vmem:[%s12 + $0x40] sm:$0xff]
        %v1168 = vld [vmem:[%s12 + $0x48] sm:$0xff]
        %v1169 = vld [vmem:[%s12 + $0x50] sm:$0xff]
        %v1170 = vld [vmem:[%s12 + $0x58] sm:$0xff]
        %v1171 = vld [vmem:[%s12 + $0x60] sm:$0xff]
        %v1172 = vld [vmem:[%s12 + $0x68] sm:$0xff]
        %v1173 = vld [vmem:[%s12 + $0x70] sm:$0xff]
        %v1174 = vld [vmem:[%s12 + $0x78] sm:$0xff]
        %v1175 = vld [vmem:[%s13] sm:$0x1]
        %v1177 = vperm.slane %v1175, 0
        %1179 = vmatpush.msra.mxu0 %v1174
        %1180 = vmatpush.msra.mxu0 %v1173
        %1181 = vmatpush.msra.mxu0 %v1172
        %1182 = vmatpush.msra.mxu0 %v1171
        %1183 = vmatpush.msra.mxu0 %v1170
        %1184 = vmatpush.msra.mxu0 %v1169
        %1185 = vmatpush.msra.mxu0 %v1168
        %1186 = vmatpush.msra.mxu0 %v1167
        %1187 = vmatpush.msra.mxu0 %v1166
        %1188 = vmatpush.msra.mxu0 %v1165
        %1189 = vmatpush.msra.mxu0 %v1164
        %1190 = vmatpush.msra.mxu0 %v1163
        %1191 = vmatpush.msra.mxu0 %v1162
        %1192 = vmatpush.msra.mxu0 %v1161
        %1193 = vmatpush.msra.mxu0 %v1160
        %1194 = vmatpush.msra.mxu0 %v1159
        %1195 = vmatmul.f32.gmra.mxu0 %v1158
        %v1196 = vpop.f32.mrf.mxu0
        %v1197 = vadd.f32 %v1177, %v1196
        %1198 = vdwg.mxu0
        %v1199 = vadd.f32 %v1126, %v1197
        %v1200 = vld [vmem:[%s16] sm:$0x1]
        %v1201 = vld [vmem:[%s17] sm:$0x1]
        %v1202 = vsel %vm637, %v1199, 0.0
        %1203 = vadd.xlane.f32.xlu0 %v1202
        %v1204 = vpop.xlane.xlu0 %1203
        %v1205 = vmul.f32 %v1204, %v1099
        %v1206 = vsub.f32 %v1199, %v1205
        %v1207 = vmul.f32 %v1206, %v1206
        %v1208 = vsel %vm637, %v1207, 0.0
        %1209 = vadd.xlane.f32.xlu0 %v1208
        %v1210 = vpop.xlane.xlu0 %1209
        %v1211 = vmul.f32 %v1210, %v1099
        %v1212 = vadd.f32 %v1211, 1e-05
        %v1213 = vrsqrt.pop %v1212
        %v1214 = vmul.f32 %v1213, %v1212
        %v1215 = vmul.f32 %v1214, %v1213
        %v1216 = vmul.f32 0.5, %v1215
        %v1217 = vsub.f32 1.5, %v1216
        %v1218 = vmul.f32 %v1213, %v1217
        %vm1219 = vweird.f32 %v1212
        %vm1220 = vweird.f32 %v1213
        %vm1221 = vmor %vm1219, %vm1220
        %v1222 = vsel %vm1221, %v1213, %v1218
        %v1223 = vmul.f32 %v1206, %v1222
        %v1225 = vperm.slane %v1200, 0
        %v1227 = vmul.f32 %v1223, %v1225
        %v1229 = vperm.slane %v1201, 0
        %v1231 = vadd.f32 %v1227, %v1229
        %1232 = vst.msk [vmem:[%s627] sm:$0xff] %vm637, %v1231
        %s1233 = sand.u32 %s434, 1
        %s1234 = scalar_lea.sflag [#allocation4], %s1233
        %s1235 = sand.u32 %s434, 1
        %s1236 = smul.addr %s1235, 8
        %s1237 = scalar_lea.vmem [#allocation7], %s1236
        // Predicated region
        $region101: #{tpu_custom_call.1} parent=91 // pred_check
          %p1238 = pneg %p444
        $region102: #{tpu_custom_call.1} parent=91 // pred_check_branch
          %1240 = sbr.rel (%p1238) target = $region104
        $region103: #{tpu_custom_call.1} parent=91 // pred_region
          %1242 = vsyncadd %s1234, 0
          %s1243 = smul.addr %s38, 8
          %s1244 = scalar_lea.hbm %s18, %s1243
          %s1246 = sshll.u32 %s1237, 4
          %s1247 = int_to_ptr.vmem [resolvable:$true] %s1246
          %s1248 = sshll.u32 %s1244, 4
          %s1249 = int_to_ptr.hbm [resolvable:$true] %s1248
          %1251 = dma.vmem_to_hbm [thread:$0]  %s1247, 128, %s1249, %s1234
        $region104: #{tpu_custom_call.1} parent=91 // pred_fallthru
          _
      $region92: #{tpu_custom_call.1} parent=5 // pred_fallthru
        _
      %p1252 = scmp.le.s32.totalorder 2, %s33
      // Predicated region
      $region105: #{tpu_custom_call.1} parent=5 // pred_check
        %p1253 = pneg %p1252
      $region106: #{tpu_custom_call.1} parent=5 // pred_check_branch
        %1255 = sbr.rel (%p1253) target = $region108
      $region107: #{tpu_custom_call.1} parent=5 // pred_region
        %s1256 = ssub.s32 %s33, 2
        // Predicated region
        $region109: #{tpu_custom_call.1} parent=107 // pred_check
          %p1257 = pneg %p450
        $region110: #{tpu_custom_call.1} parent=107 // pred_check_branch
          %1259 = sbr.rel (%p1257) target = $region112
        $region111: #{tpu_custom_call.1} parent=107 // pred_region
          %s1260 = sand.u32 %s435, 1
          %s1261 = scalar_lea.sflag [#allocation4], %s1260
          %s1262 = sand.u32 %s435, 1
          %s1263 = smul.addr %s1262, 8
          %s1264 = scalar_lea.vmem [#allocation7], %s1263
          %1266 = dma.done %s1261, 128
        $region112: #{tpu_custom_call.1} parent=107 // pred_fallthru
          _
      $region108: #{tpu_custom_call.1} parent=5 // pred_fallthru
        _
    $region6: #{tpu_custom_call.1} parent=1 // loop_footer
      %s37 = sadd.s32 1, %s33
    $region7: #{tpu_custom_call.1} parent=1 // loop_footer_branch
      %32 = sbr.rel target = $region3
    $region8: #{tpu_custom_call.1} parent=1 // loop_exit
      _
    %1267 = vsyncpa [#allocation3], 1
    %s1268 = scalar_lea.sflag [#allocation3], 1
    %1269 = vsyncpa %s1268, 1
    %1270 = vsyncpa [#allocation6], 1
    %s1271 = scalar_lea.sflag [#allocation6], 1
    %1272 = vsyncpa %s1271, 1
    %1273 = vsyncpa [#allocation4], 1
    %s1274 = scalar_lea.sflag [#allocation4], 1
    %1275 = vsyncpa %s1274, 1

</llo_original>
